<compile_context>
chip_gen: v5e
topology: v5e:2x2
jax: 0.10.0
libtpu: 0.0.40
codegen_flags: <defaults>
</compile_context>

<pallas_src>
import math

import jax
import jax.numpy as jnp
from jax.experimental import pallas as pl
from jax.experimental.pallas import tpu as pltpu


def _round_up(x, m):
    return ((x + m - 1) // m) * m


def _optconv_gemm_kernel(p_ref, w_ref, b_ref, o_ref):
    """Accumulating GEMM tile: o[tm, Cp] += p[tm, tk] @ w[tk, Cp]; bias at last k."""
    kk = pl.program_id(1)

    @pl.when(kk == 0)
    def _init():
        o_ref[...] = jnp.zeros_like(o_ref)

    # bf16 x bf16 -> f32 accumulation on the MXU.
    o_ref[...] += jnp.dot(p_ref[...], w_ref[...],
                          preferred_element_type=jnp.float32)

    @pl.when(kk == pl.num_programs(1) - 1)
    def _finalize():
        o_ref[...] += b_ref[...]          # (1, Cp) broadcast over tm rows


def optical_conv2d_forward(x, kernel, bias, *, input_size, kernel_size,
                           tm=1024, tk_max=2048, compute_dtype=jnp.bfloat16):
    """Forward pass of OpticalConv2d (noiseless). x: (B, C_in, H, W) NCHW."""
    assert kernel_size <= input_size, "only the kernel_size <= input_size path is supported"
    B, C_in, _, _ = x.shape
    C_out = kernel.shape[0]
    k = kernel_size
    N = input_size + 4                 # beam_size_px
    p = (N - k) // 2                   # left/top pad of the centered kernel
    s = N // 2 + p                     # fftshift + centering offset

    # ---- glue (plain JAX, O(k^2 * input)): circular im2col ------------------
    img = jnp.pad(x, ((0, 0), (0, 0), (2, 2), (2, 2))).astype(compute_dtype)

    taps = []
    for a in range(k):
        for b2 in range(k):
            # roll(img, s+a)[x] == img[(x - s - a) % N]
            taps.append(jnp.roll(img, shift=(s + a, s + b2), axis=(-2, -1)))
    patches = jnp.stack(taps, axis=2)                    # (B, C_in, k*k, N, N)
    patches = jnp.transpose(patches, (0, 3, 4, 1, 2))    # (B, N, N, C_in, k*k)

    M = B * N * N
    Kd = C_in * k * k
    patches = patches.reshape(M, Kd)

    # Weight / bias prep is O(C_out*C_in*k^2) — cheap; precompute per weight
    # update in a training loop if desired.
    Wm = jnp.transpose(kernel.reshape(C_out, Kd)).astype(compute_dtype)  # (Kd, C_out)
    b_vec = bias.reshape(C_out).astype(jnp.float32)

    # ---- TPU-friendly tiling / padding ---------------------------------------
    # Reduction (K) tiling: a single full-width tile when it fits (block equals
    # the full padded dim, so the (8,128) rule is satisfied), else 2048-wide
    # chunks (multiple of 128) accumulated over the "arbitrary" grid axis.
    if Kd <= tk_max:
        tk = _round_up(Kd, 16)            # bf16 sublane-aligned, full dim
        Kd_pad = tk
    else:
        tk = tk_max
        Kd_pad = _round_up(Kd, tk)

    # M tiling: single tile with no padding waste when the whole problem fits;
    # otherwise fixed 1024-row tiles (still < ~16 MiB double-buffered VMEM).
    tm_eff = _round_up(M, 8) if M <= tm else tm
    M_pad = _round_up(M, tm_eff)

    C_out_pad = _round_up(C_out, 128)     # lane-dense output columns (unmasked vst)

    patches = jnp.pad(patches, ((0, M_pad - M), (0, Kd_pad - Kd)))
    Wm = jnp.pad(Wm, ((0, Kd_pad - Kd), (0, C_out_pad - C_out)))
    b_row = jnp.pad(b_vec, (0, C_out_pad - C_out)).reshape(1, C_out_pad)

    nm = M_pad // tm_eff
    nk = Kd_pad // tk

    # ---- hot path: Pallas kernel ---------------------------------------------
    out_flat = pl.pallas_call(
        _optconv_gemm_kernel,
        out_shape=jax.ShapeDtypeStruct((M_pad, C_out_pad), jnp.float32),
        grid=(nm, nk),                                   # reduction axis last
        in_specs=[
            pl.BlockSpec((tm_eff, tk), lambda i, kk: (i, kk)),      # patches tile
            pl.BlockSpec((tk, C_out_pad), lambda i, kk: (kk, 0)),   # weight tile
            pl.BlockSpec((1, C_out_pad), lambda i, kk: (0, 0)),     # bias row
        ],
        out_specs=pl.BlockSpec((tm_eff, C_out_pad), lambda i, kk: (i, 0)),
        compiler_params=pltpu.CompilerParams(
            dimension_semantics=("parallel", "arbitrary"),
            vmem_limit_bytes=32 * 1024 * 1024,
        ),
    )(patches, Wm, b_row)

    out = out_flat[:M, :C_out].reshape(B, N, N, C_out)   # NHWC
    out = jnp.transpose(out, (0, 3, 1, 2))               # -> NCHW (B, C_out, N, N)
    return out


def _reference_forward(x, kernel, bias, *, input_size, kernel_size):
    """Pure-JAX FFT reference of the same noiseless semantics."""
    C_out = kernel.shape[0]
    N = input_size + 4
    img = jnp.pad(x, ((0, 0), (0, 0), (2, 2), (2, 2))).astype(jnp.float32)
    p = (N - kernel_size) // 2
    ker = jnp.pad(kernel, ((0, 0), (0, 0), (p, p), (p, p)))
    if ker.shape[-1] != N:
        ker = jnp.pad(ker, ((0, 0), (0, 0), (0, 1), (0, 1)))
    F_img = jnp.fft.fft2(img)                      # (B, C_in, N, N)
    F_ker = jnp.fft.fft2(ker.astype(jnp.float32))  # (C_out, C_in, N, N)
    conv = jnp.real(jnp.fft.ifft2(F_img[:, None] * F_ker[None]))  # (B,C_out,C_in,N,N)
    conv = jnp.fft.fftshift(conv, axes=(-2, -1))
    out = conv.sum(axis=2).astype(jnp.float32)
    out = out + bias.reshape(1, C_out, 1, 1)
    return out


if __name__ == "__main__":
    # small shapes consistent with the module
    B, C_in, C_out = 2, 4, 4
    input_size, kernel_size = 16, 3

    key = jax.random.PRNGKey(0)
    k_w, k_b, k_x = jax.random.split(key, 3)

    # kaiming_uniform_(a=sqrt(5)) on (C_out, C_in, k, k)  ->  U(-1/sqrt(fan_in), ...)
    fan_in = C_in * kernel_size * kernel_size
    bound = 1.0 / math.sqrt(fan_in)
    kernel = jax.random.uniform(
        k_w, (C_out, C_in, kernel_size, kernel_size), jnp.float32, -bound, bound
    )
    bias = jax.random.uniform(k_b, (C_out, 1, 1), jnp.float32, -bound, bound)

    x = jax.random.normal(k_x, (B, C_in, input_size, input_size), jnp.float32)

    out = optical_conv2d_forward(
        x, kernel, bias, input_size=input_size, kernel_size=kernel_size
    )
    out = jax.block_until_ready(out)

    ref = _reference_forward(
        x, kernel, bias, input_size=input_size, kernel_size=kernel_size
    )
    assert out.shape == (B, C_out, input_size + 4, input_size + 4)
    assert out.dtype == jnp.float32
    # bf16-streamed operands with f32 MXU accumulation: ~1e-3 typical error.
    assert jnp.allclose(out, ref, rtol=1e-2, atol=1e-2), "mismatch vs FFT reference"

    print("KERNEL_OK")
</pallas_src>

<mosaic_0001>
module attributes {stable_mosaic.version = 11 : i64} {
  func.func @_optconv_gemm_kernel(%arg0: i32, %arg1: i32, %arg2: memref<800x48xbf16, #tpu.memory_space<vmem>>, %arg3: memref<48x128xbf16, #tpu.memory_space<vmem>>, %arg4: memref<1x128xf32, #tpu.memory_space<vmem>>, %arg5: memref<800x128xf32, #tpu.memory_space<vmem>>) attributes {dimension_semantics = [#tpu.dimension_semantics<parallel>, #tpu.dimension_semantics<arbitrary>], iteration_bounds = array<i64: 1, 1>, scalar_prefetch = 0 : i64, scratch_operands = 0 : i64, tpu.core_type = #tpu.core_type<tc>, window_params = [{transform_indices = @transform_0, window_bounds = array<i64: 800, 48>}, {transform_indices = @transform_1, window_bounds = array<i64: 48, 128>}, {pipeline_mode = #tpu.pipeline_mode<synchronous>, transform_indices = @transform_2, window_bounds = array<i64: 1, 128>}, {transform_indices = @transform_3, window_bounds = array<i64: 800, 128>}]} {
    %c0_i32 = arith.constant 0 : i32
    %0 = arith.cmpi eq, %arg1, %c0_i32 : i32
    %1 = arith.extui %0 : i1 to i32
    %c0_i32_0 = arith.constant 0 : i32
    %2 = arith.cmpi ne, %1, %c0_i32_0 : i32
    scf.if %2 {
      %cst_10 = arith.constant 0.000000e+00 : f32
      %12 = vector.broadcast %cst_10 : f32 to vector<800x128xf32>
      %c0_11 = arith.constant 0 : index
      %c0_12 = arith.constant 0 : index
      %13 = vector.load %arg5[%c0_11, %c0_12] : memref<800x128xf32, #tpu.memory_space<vmem>>, vector<800x128xf32>
      tpu.vector_store %arg5[%c0_11, %c0_12], %12 {strides = array<i32>} : memref<800x128xf32, #tpu.memory_space<vmem>>, vector<800x128xf32>,
    } else {
    }
    %c0 = arith.constant 0 : index
    %c0_1 = arith.constant 0 : index
    %3 = vector.load %arg5[%c0, %c0_1] : memref<800x128xf32, #tpu.memory_space<vmem>>, vector<800x128xf32>
    %c0_2 = arith.constant 0 : index
    %c0_3 = arith.constant 0 : index
    %4 = vector.load %arg2[%c0_2, %c0_3] : memref<800x48xbf16, #tpu.memory_space<vmem>>, vector<800x48xbf16>
    %c0_4 = arith.constant 0 : index
    %c0_5 = arith.constant 0 : index
    %5 = vector.load %arg3[%c0_4, %c0_5] : memref<48x128xbf16, #tpu.memory_space<vmem>>, vector<48x128xbf16>
    %cst = arith.constant dense<0.000000e+00> : vector<800x128xf32>
    %6 = tpu.matmul %4, %5, %cst {dimension_numbers = #tpu.dot_dimension_numbers<[1], [0], [0], [1], [0, 0, 1, 1], [], []>} : vector<800x48xbf16>, vector<48x128xbf16>, vector<800x128xf32> -> vector<800x128xf32>
    %7 = arith.addf %3, %6 : vector<800x128xf32>
    %c0_6 = arith.constant 0 : index
    %c0_7 = arith.constant 0 : index
    %8 = vector.load %arg5[%c0_6, %c0_7] : memref<800x128xf32, #tpu.memory_space<vmem>>, vector<800x128xf32>
    tpu.vector_store %arg5[%c0_6, %c0_7], %7 {strides = array<i32>} : memref<800x128xf32, #tpu.memory_space<vmem>>, vector<800x128xf32>,
    %c0_i32_8 = arith.constant 0 : i32
    %9 = arith.cmpi eq, %arg1, %c0_i32_8 : i32
    %10 = arith.extui %9 : i1 to i32
    %c0_i32_9 = arith.constant 0 : i32
    %11 = arith.cmpi ne, %10, %c0_i32_9 : i32
    scf.if %11 {
      %c0_10 = arith.constant 0 : index
      %c0_11 = arith.constant 0 : index
      %12 = vector.load %arg5[%c0_10, %c0_11] : memref<800x128xf32, #tpu.memory_space<vmem>>, vector<800x128xf32>
      %c0_12 = arith.constant 0 : index
      %c0_13 = arith.constant 0 : index
      %13 = vector.load %arg4[%c0_12, %c0_13] : memref<1x128xf32, #tpu.memory_space<vmem>>, vector<1x128xf32>
      %14 = vector.broadcast %13 : vector<1x128xf32> to vector<800x128xf32>
      %15 = arith.addf %12, %14 : vector<800x128xf32>
      %c0_14 = arith.constant 0 : index
      %c0_15 = arith.constant 0 : index
      %16 = vector.load %arg5[%c0_14, %c0_15] : memref<800x128xf32, #tpu.memory_space<vmem>>, vector<800x128xf32>
      tpu.vector_store %arg5[%c0_14, %c0_15], %15 {strides = array<i32>} : memref<800x128xf32, #tpu.memory_space<vmem>>, vector<800x128xf32>,
    } else {
    }
    return
  }
  func.func @transform_0(%arg0: i32, %arg1: i32) -> (i32, i32) {
    %c0_i32 = arith.constant 0 : i32
    return %arg0, %arg1 : i32, i32
  }
  func.func @transform_1(%arg0: i32, %arg1: i32) -> (i32, i32) {
    %c0_i32 = arith.constant 0 : i32
    %c0_i32_0 = arith.constant 0 : i32
    return %arg1, %c0_i32 : i32, i32
  }
  func.func @transform_2(%arg0: i32, %arg1: i32) -> (i32, i32) {
    %c0_i32 = arith.constant 0 : i32
    %c0_i32_0 = arith.constant 0 : i32
    %c0_i32_1 = arith.constant 0 : i32
    return %c0_i32, %c0_i32_0 : i32, i32
  }
  func.func @transform_3(%arg0: i32, %arg1: i32) -> (i32, i32) {
    %c0_i32 = arith.constant 0 : i32
    %c0_i32_0 = arith.constant 0 : i32
    return %arg0, %c0_i32 : i32, i32
  }
}

</mosaic_0001>

<llo_original>
// kernel: tpu_custom_call.1
$region0: #{tpu_custom_call.1}
  #allocation0 [shape = 'u32[]', space=smem, size = 0x4, offset = 0x4, fixed_abs, tag = 'smem constant byte address 0x4 - core index']
  #allocation1 [shape = 'u32[72,128]{1,0:T(1,128)}', space=vmem, size = 0x9000, scoped, tag = 'internal scratch']
  %s0 = inlined_call_operand.vmem [shape: bf16[800,48], index: 0, kind: input, shape index: {}]
  %s1 = inlined_call_operand.vmem [shape: bf16[48,128], index: 1, kind: input, shape index: {}]
  %s2 = inlined_call_operand.vmem [shape: f32[1,128], index: 2, kind: input, shape index: {}]
  %s3 = inlined_call_operand.hbm [shape: f32[800,128], index: 3, kind: output, shape index: {}]
  %s4 = sld [smem:[#allocation0]]
  $region30: #{tpu_custom_call.1} parent=0
    _
  %s6 = ssub.s32 1, %s4
  %s7 = scalar_select 0, %s6, %s4
  $region1: #{tpu_custom_call.1} parent=0
    #allocation2 [shape = 'u8[409600]{0}', space=vmem, size = 0x64000, scoped, tag = 'output window, operand 0, single buffered']
    #allocation3 [shape = 's32[1]{0}', space=sflag, size = 0x4, scoped, tag = 'scoped memory for tpu_custom_call.1']
    %8 = vsyncpa [#allocation3], 0
    // Predicated region
    $region2: #{tpu_custom_call.1} parent=1 // pred_check
      _
    $region3: #{tpu_custom_call.1} parent=1 // pred_check_branch
      %10 = sbr.rel (0) target = $region5
    $region4: #{tpu_custom_call.1} parent=1 // pred_region
      _
    $region5: #{tpu_custom_call.1} parent=1 // pred_fallthru
      _
    // Predicated region
    $region6: #{tpu_custom_call.1} parent=1 // pred_check
      _
    $region7: #{tpu_custom_call.1} parent=1 // pred_check_branch
      %12 = sbr.rel (0) target = $region9
    $region8: #{tpu_custom_call.1} parent=1 // pred_region
      _
    $region9: #{tpu_custom_call.1} parent=1 // pred_fallthru
      _
    // Predicated region
    $region10: #{tpu_custom_call.1} parent=1 // pred_check
      _
    $region11: #{tpu_custom_call.1} parent=1 // pred_check_branch
      %14 = sbr.rel (0) target = $region13
    $region12: #{tpu_custom_call.1} parent=1 // pred_region
      _
    $region13: #{tpu_custom_call.1} parent=1 // pred_fallthru
      _
    %p16 = scmp.eq.s32.totalorder 0, 0
    // Predicated region
    $region14: #{tpu_custom_call.1} parent=1 // pred_check
      %p17 = pneg %p16
    $region15: #{tpu_custom_call.1} parent=1 // pred_check_branch
      %19 = sbr.rel (%p17) target = $region17
    $region16: #{tpu_custom_call.1} parent=1 // pred_region
      %20 = vst [vmem:[#allocation2] sm:$0xff] 0.0
      %21 = vst [vmem:[#allocation2 + $0x8] sm:$0xff] 0.0
      %22 = vst [vmem:[#allocation2 + $0x10] sm:$0xff] 0.0
      %23 = vst [vmem:[#allocation2 + $0x18] sm:$0xff] 0.0
      %24 = vst [vmem:[#allocation2 + $0x20] sm:$0xff] 0.0
      %25 = vst [vmem:[#allocation2 + $0x28] sm:$0xff] 0.0
      %26 = vst [vmem:[#allocation2 + $0x30] sm:$0xff] 0.0
      %27 = vst [vmem:[#allocation2 + $0x38] sm:$0xff] 0.0
      %28 = vst [vmem:[#allocation2 + $0x40] sm:$0xff] 0.0
      %29 = vst [vmem:[#allocation2 + $0x48] sm:$0xff] 0.0
      %30 = vst [vmem:[#allocation2 + $0x50] sm:$0xff] 0.0
      %31 = vst [vmem:[#allocation2 + $0x58] sm:$0xff] 0.0
      %32 = vst [vmem:[#allocation2 + $0x60] sm:$0xff] 0.0
      %33 = vst [vmem:[#allocation2 + $0x68] sm:$0xff] 0.0
      %34 = vst [vmem:[#allocation2 + $0x70] sm:$0xff] 0.0
      %35 = vst [vmem:[#allocation2 + $0x78] sm:$0xff] 0.0
      %36 = vst [vmem:[#allocation2 + $0x80] sm:$0xff] 0.0
      %37 = vst [vmem:[#allocation2 + $0x88] sm:$0xff] 0.0
      %38 = vst [vmem:[#allocation2 + $0x90] sm:$0xff] 0.0
      %39 = vst [vmem:[#allocation2 + $0x98] sm:$0xff] 0.0
      %40 = vst [vmem:[#allocation2 + $0xa0] sm:$0xff] 0.0
      %41 = vst [vmem:[#allocation2 + $0xa8] sm:$0xff] 0.0
      %42 = vst [vmem:[#allocation2 + $0xb0] sm:$0xff] 0.0
      %43 = vst [vmem:[#allocation2 + $0xb8] sm:$0xff] 0.0
      %44 = vst [vmem:[#allocation2 + $0xc0] sm:$0xff] 0.0
      %45 = vst [vmem:[#allocation2 + $0xc8] sm:$0xff] 0.0
      %46 = vst [vmem:[#allocation2 + $0xd0] sm:$0xff] 0.0
      %47 = vst [vmem:[#allocation2 + $0xd8] sm:$0xff] 0.0
      %48 = vst [vmem:[#allocation2 + $0xe0] sm:$0xff] 0.0
      %49 = vst [vmem:[#allocation2 + $0xe8] sm:$0xff] 0.0
      %50 = vst [vmem:[#allocation2 + $0xf0] sm:$0xff] 0.0
      %51 = vst [vmem:[#allocation2 + $0xf8] sm:$0xff] 0.0
      %52 = vst [vmem:[#allocation2 + $0x100] sm:$0xff] 0.0
      %53 = vst [vmem:[#allocation2 + $0x108] sm:$0xff] 0.0
      %54 = vst [vmem:[#allocation2 + $0x110] sm:$0xff] 0.0
      %55 = vst [vmem:[#allocation2 + $0x118] sm:$0xff] 0.0
      %56 = vst [vmem:[#allocation2 + $0x120] sm:$0xff] 0.0
      %57 = vst [vmem:[#allocation2 + $0x128] sm:$0xff] 0.0
      %58 = vst [vmem:[#allocation2 + $0x130] sm:$0xff] 0.0
      %59 = vst [vmem:[#allocation2 + $0x138] sm:$0xff] 0.0
      %60 = vst [vmem:[#allocation2 + $0x140] sm:$0xff] 0.0
      %61 = vst [vmem:[#allocation2 + $0x148] sm:$0xff] 0.0
      %62 = vst [vmem:[#allocation2 + $0x150] sm:$0xff] 0.0
      %63 = vst [vmem:[#allocation2 + $0x158] sm:$0xff] 0.0
      %64 = vst [vmem:[#allocation2 + $0x160] sm:$0xff] 0.0
      %65 = vst [vmem:[#allocation2 + $0x168] sm:$0xff] 0.0
      %66 = vst [vmem:[#allocation2 + $0x170] sm:$0xff] 0.0
      %67 = vst [vmem:[#allocation2 + $0x178] sm:$0xff] 0.0
      %68 = vst [vmem:[#allocation2 + $0x180] sm:$0xff] 0.0
      %69 = vst [vmem:[#allocation2 + $0x188] sm:$0xff] 0.0
      %70 = vst [vmem:[#allocation2 + $0x190] sm:$0xff] 0.0
      %71 = vst [vmem:[#allocation2 + $0x198] sm:$0xff] 0.0
      %72 = vst [vmem:[#allocation2 + $0x1a0] sm:$0xff] 0.0
      %73 = vst [vmem:[#allocation2 + $0x1a8] sm:$0xff] 0.0
      %74 = vst [vmem:[#allocation2 + $0x1b0] sm:$0xff] 0.0
      %75 = vst [vmem:[#allocation2 + $0x1b8] sm:$0xff] 0.0
      %76 = vst [vmem:[#allocation2 + $0x1c0] sm:$0xff] 0.0
      %77 = vst [vmem:[#allocation2 + $0x1c8] sm:$0xff] 0.0
      %78 = vst [vmem:[#allocation2 + $0x1d0] sm:$0xff] 0.0
      %79 = vst [vmem:[#allocation2 + $0x1d8] sm:$0xff] 0.0
      %80 = vst [vmem:[#allocation2 + $0x1e0] sm:$0xff] 0.0
      %81 = vst [vmem:[#allocation2 + $0x1e8] sm:$0xff] 0.0
      %82 = vst [vmem:[#allocation2 + $0x1f0] sm:$0xff] 0.0
      %83 = vst [vmem:[#allocation2 + $0x1f8] sm:$0xff] 0.0
      %84 = vst [vmem:[#allocation2 + $0x200] sm:$0xff] 0.0
      %85 = vst [vmem:[#allocation2 + $0x208] sm:$0xff] 0.0
      %86 = vst [vmem:[#allocation2 + $0x210] sm:$0xff] 0.0
      %87 = vst [vmem:[#allocation2 + $0x218] sm:$0xff] 0.0
      %88 = vst [vmem:[#allocation2 + $0x220] sm:$0xff] 0.0
      %89 = vst [vmem:[#allocation2 + $0x228] sm:$0xff] 0.0
      %90 = vst [vmem:[#allocation2 + $0x230] sm:$0xff] 0.0
      %91 = vst [vmem:[#allocation2 + $0x238] sm:$0xff] 0.0
      %92 = vst [vmem:[#allocation2 + $0x240] sm:$0xff] 0.0
      %93 = vst [vmem:[#allocation2 + $0x248] sm:$0xff] 0.0
      %94 = vst [vmem:[#allocation2 + $0x250] sm:$0xff] 0.0
      %95 = vst [vmem:[#allocation2 + $0x258] sm:$0xff] 0.0
      %96 = vst [vmem:[#allocation2 + $0x260] sm:$0xff] 0.0
      %97 = vst [vmem:[#allocation2 + $0x268] sm:$0xff] 0.0
      %98 = vst [vmem:[#allocation2 + $0x270] sm:$0xff] 0.0
      %99 = vst [vmem:[#allocation2 + $0x278] sm:$0xff] 0.0
      %100 = vst [vmem:[#allocation2 + $0x280] sm:$0xff] 0.0
      %101 = vst [vmem:[#allocation2 + $0x288] sm:$0xff] 0.0
      %102 = vst [vmem:[#allocation2 + $0x290] sm:$0xff] 0.0
      %103 = vst [vmem:[#allocation2 + $0x298] sm:$0xff] 0.0
      %104 = vst [vmem:[#allocation2 + $0x2a0] sm:$0xff] 0.0
      %105 = vst [vmem:[#allocation2 + $0x2a8] sm:$0xff] 0.0
      %106 = vst [vmem:[#allocation2 + $0x2b0] sm:$0xff] 0.0
      %107 = vst [vmem:[#allocation2 + $0x2b8] sm:$0xff] 0.0
      %108 = vst [vmem:[#allocation2 + $0x2c0] sm:$0xff] 0.0
      %109 = vst [vmem:[#allocation2 + $0x2c8] sm:$0xff] 0.0
      %110 = vst [vmem:[#allocation2 + $0x2d0] sm:$0xff] 0.0
      %111 = vst [vmem:[#allocation2 + $0x2d8] sm:$0xff] 0.0
      %112 = vst [vmem:[#allocation2 + $0x2e0] sm:$0xff] 0.0
      %113 = vst [vmem:[#allocation2 + $0x2e8] sm:$0xff] 0.0
      %114 = vst [vmem:[#allocation2 + $0x2f0] sm:$0xff] 0.0
      %115 = vst [vmem:[#allocation2 + $0x2f8] sm:$0xff] 0.0
      %116 = vst [vmem:[#allocation2 + $0x300] sm:$0xff] 0.0
      %117 = vst [vmem:[#allocation2 + $0x308] sm:$0xff] 0.0
      %118 = vst [vmem:[#allocation2 + $0x310] sm:$0xff] 0.0
      %119 = vst [vmem:[#allocation2 + $0x318] sm:$0xff] 0.0
    $region17: #{tpu_custom_call.1} parent=1 // pred_fallthru
      _
    %v120 = vld [vmem:[#allocation2] sm:$0xff]
    %v121 = vld [vmem:[#allocation2 + $0x8] sm:$0xff]
    %v122 = vld [vmem:[#allocation2 + $0x10] sm:$0xff]
    %v123 = vld [vmem:[#allocation2 + $0x18] sm:$0xff]
    %v124 = vld [vmem:[#allocation2 + $0x20] sm:$0xff]
    %v125 = vld [vmem:[#allocation2 + $0x28] sm:$0xff]
    %v126 = vld [vmem:[#allocation2 + $0x30] sm:$0xff]
    %v127 = vld [vmem:[#allocation2 + $0x38] sm:$0xff]
    %v128 = vld [vmem:[#allocation2 + $0x40] sm:$0xff]
    %v129 = vld [vmem:[#allocation2 + $0x48] sm:$0xff]
    %v130 = vld [vmem:[#allocation2 + $0x50] sm:$0xff]
    %v131 = vld [vmem:[#allocation2 + $0x58] sm:$0xff]
    %v132 = vld [vmem:[#allocation2 + $0x60] sm:$0xff]
    %v133 = vld [vmem:[#allocation2 + $0x68] sm:$0xff]
    %v134 = vld [vmem:[#allocation2 + $0x70] sm:$0xff]
    %v135 = vld [vmem:[#allocation2 + $0x78] sm:$0xff]
    %v136 = vld [vmem:[#allocation2 + $0x80] sm:$0xff]
    %v137 = vld [vmem:[#allocation2 + $0x88] sm:$0xff]
    %v138 = vld [vmem:[#allocation2 + $0x90] sm:$0xff]
    %v139 = vld [vmem:[#allocation2 + $0x98] sm:$0xff]
    %v140 = vld [vmem:[#allocation2 + $0xa0] sm:$0xff]
    %v141 = vld [vmem:[#allocation2 + $0xa8] sm:$0xff]
    %v142 = vld [vmem:[#allocation2 + $0xb0] sm:$0xff]
    %v143 = vld [vmem:[#allocation2 + $0xb8] sm:$0xff]
    %v144 = vld [vmem:[#allocation2 + $0xc0] sm:$0xff]
    %v145 = vld [vmem:[#allocation2 + $0xc8] sm:$0xff]
    %v146 = vld [vmem:[#allocation2 + $0xd0] sm:$0xff]
    %v147 = vld [vmem:[#allocation2 + $0xd8] sm:$0xff]
    %v148 = vld [vmem:[#allocation2 + $0xe0] sm:$0xff]
    %v149 = vld [vmem:[#allocation2 + $0xe8] sm:$0xff]
    %v150 = vld [vmem:[#allocation2 + $0xf0] sm:$0xff]
    %v151 = vld [vmem:[#allocation2 + $0xf8] sm:$0xff]
    %v152 = vld [vmem:[#allocation2 + $0x100] sm:$0xff]
    %v153 = vld [vmem:[#allocation2 + $0x108] sm:$0xff]
    %v154 = vld [vmem:[#allocation2 + $0x110] sm:$0xff]
    %v155 = vld [vmem:[#allocation2 + $0x118] sm:$0xff]
    %v156 = vld [vmem:[#allocation2 + $0x120] sm:$0xff]
    %v157 = vld [vmem:[#allocation2 + $0x128] sm:$0xff]
    %v158 = vld [vmem:[#allocation2 + $0x130] sm:$0xff]
    %v159 = vld [vmem:[#allocation2 + $0x138] sm:$0xff]
    %v160 = vld [vmem:[#allocation2 + $0x140] sm:$0xff]
    %v161 = vld [vmem:[#allocation2 + $0x148] sm:$0xff]
    %v162 = vld [vmem:[#allocation2 + $0x150] sm:$0xff]
    %v163 = vld [vmem:[#allocation2 + $0x158] sm:$0xff]
    %v164 = vld [vmem:[#allocation2 + $0x160] sm:$0xff]
    %v165 = vld [vmem:[#allocation2 + $0x168] sm:$0xff]
    %v166 = vld [vmem:[#allocation2 + $0x170] sm:$0xff]
    %v167 = vld [vmem:[#allocation2 + $0x178] sm:$0xff]
    %v168 = vld [vmem:[#allocation2 + $0x180] sm:$0xff]
    %v169 = vld [vmem:[#allocation2 + $0x188] sm:$0xff]
    %v170 = vld [vmem:[#allocation2 + $0x190] sm:$0xff]
    %v171 = vld [vmem:[#allocation2 + $0x198] sm:$0xff]
    %v172 = vld [vmem:[#allocation2 + $0x1a0] sm:$0xff]
    %v173 = vld [vmem:[#allocation2 + $0x1a8] sm:$0xff]
    %v174 = vld [vmem:[#allocation2 + $0x1b0] sm:$0xff]
    %v175 = vld [vmem:[#allocation2 + $0x1b8] sm:$0xff]
    %v176 = vld [vmem:[#allocation2 + $0x1c0] sm:$0xff]
    %v177 = vld [vmem:[#allocation2 + $0x1c8] sm:$0xff]
    %v178 = vld [vmem:[#allocation2 + $0x1d0] sm:$0xff]
    %v179 = vld [vmem:[#allocation2 + $0x1d8] sm:$0xff]
    %v180 = vld [vmem:[#allocation2 + $0x1e0] sm:$0xff]
    %v181 = vld [vmem:[#allocation2 + $0x1e8] sm:$0xff]
    %v182 = vld [vmem:[#allocation2 + $0x1f0] sm:$0xff]
    %v183 = vld [vmem:[#allocation2 + $0x1f8] sm:$0xff]
    %v184 = vld [vmem:[#allocation2 + $0x200] sm:$0xff]
    %v185 = vld [vmem:[#allocation2 + $0x208] sm:$0xff]
    %v186 = vld [vmem:[#allocation2 + $0x210] sm:$0xff]
    %v187 = vld [vmem:[#allocation2 + $0x218] sm:$0xff]
    %v188 = vld [vmem:[#allocation2 + $0x220] sm:$0xff]
    %v189 = vld [vmem:[#allocation2 + $0x228] sm:$0xff]
    %v190 = vld [vmem:[#allocation2 + $0x230] sm:$0xff]
    %v191 = vld [vmem:[#allocation2 + $0x238] sm:$0xff]
    %v192 = vld [vmem:[#allocation2 + $0x240] sm:$0xff]
    %v193 = vld [vmem:[#allocation2 + $0x248] sm:$0xff]
    %v194 = vld [vmem:[#allocation2 + $0x250] sm:$0xff]
    %v195 = vld [vmem:[#allocation2 + $0x258] sm:$0xff]
    %v196 = vld [vmem:[#allocation2 + $0x260] sm:$0xff]
    %v197 = vld [vmem:[#allocation2 + $0x268] sm:$0xff]
    %v198 = vld [vmem:[#allocation2 + $0x270] sm:$0xff]
    %v199 = vld [vmem:[#allocation2 + $0x278] sm:$0xff]
    %v200 = vld [vmem:[#allocation2 + $0x280] sm:$0xff]
    %v201 = vld [vmem:[#allocation2 + $0x288] sm:$0xff]
    %v202 = vld [vmem:[#allocation2 + $0x290] sm:$0xff]
    %v203 = vld [vmem:[#allocation2 + $0x298] sm:$0xff]
    %v204 = vld [vmem:[#allocation2 + $0x2a0] sm:$0xff]
    %v205 = vld [vmem:[#allocation2 + $0x2a8] sm:$0xff]
    %v206 = vld [vmem:[#allocation2 + $0x2b0] sm:$0xff]
    %v207 = vld [vmem:[#allocation2 + $0x2b8] sm:$0xff]
    %v208 = vld [vmem:[#allocation2 + $0x2c0] sm:$0xff]
    %v209 = vld [vmem:[#allocation2 + $0x2c8] sm:$0xff]
    %v210 = vld [vmem:[#allocation2 + $0x2d0] sm:$0xff]
    %v211 = vld [vmem:[#allocation2 + $0x2d8] sm:$0xff]
    %v212 = vld [vmem:[#allocation2 + $0x2e0] sm:$0xff]
    %v213 = vld [vmem:[#allocation2 + $0x2e8] sm:$0xff]
    %v214 = vld [vmem:[#allocation2 + $0x2f0] sm:$0xff]
    %v215 = vld [vmem:[#allocation2 + $0x2f8] sm:$0xff]
    %v216 = vld [vmem:[#allocation2 + $0x300] sm:$0xff]
    %v217 = vld [vmem:[#allocation2 + $0x308] sm:$0xff]
    %v218 = vld [vmem:[#allocation2 + $0x310] sm:$0xff]
    %v219 = vld [vmem:[#allocation2 + $0x318] sm:$0xff]
    %v220 = vld [vmem:[%s0] sm:$0xf]
    %v221 = vld [vmem:[%s0 + $0x4] sm:$0xf]
    %v222 = vld [vmem:[%s0 + $0x8] sm:$0xf]
    %v223 = vld [vmem:[%s0 + $0xc] sm:$0xf]
    %v224 = vld [vmem:[%s0 + $0x10] sm:$0xf]
    %v225 = vld [vmem:[%s0 + $0x14] sm:$0xf]
    %v226 = vld [vmem:[%s0 + $0x18] sm:$0xf]
    %v227 = vld [vmem:[%s0 + $0x1c] sm:$0xf]
    %v228 = vld [vmem:[%s0 + $0x20] sm:$0xf]
    %v229 = vld [vmem:[%s0 + $0x24] sm:$0xf]
    %v230 = vld [vmem:[%s0 + $0x28] sm:$0xf]
    %v231 = vld [vmem:[%s0 + $0x2c] sm:$0xf]
    %v232 = vld [vmem:[%s0 + $0x30] sm:$0xf]
    %v233 = vld [vmem:[%s0 + $0x34] sm:$0xf]
    %v234 = vld [vmem:[%s0 + $0x38] sm:$0xf]
    %v235 = vld [vmem:[%s0 + $0x3c] sm:$0xf]
    %v236 = vld [vmem:[%s0 + $0x40] sm:$0xf]
    %v237 = vld [vmem:[%s0 + $0x44] sm:$0xf]
    %v238 = vld [vmem:[%s0 + $0x48] sm:$0xf]
    %v239 = vld [vmem:[%s0 + $0x4c] sm:$0xf]
    %v240 = vld [vmem:[%s0 + $0x50] sm:$0xf]
    %v241 = vld [vmem:[%s0 + $0x54] sm:$0xf]
    %v242 = vld [vmem:[%s0 + $0x58] sm:$0xf]
    %v243 = vld [vmem:[%s0 + $0x5c] sm:$0xf]
    %v244 = vld [vmem:[%s0 + $0x60] sm:$0xf]
    %v245 = vld [vmem:[%s0 + $0x64] sm:$0xf]
    %v246 = vld [vmem:[%s0 + $0x68] sm:$0xf]
    %v247 = vld [vmem:[%s0 + $0x6c] sm:$0xf]
    %v248 = vld [vmem:[%s0 + $0x70] sm:$0xf]
    %v249 = vld [vmem:[%s0 + $0x74] sm:$0xf]
    %v250 = vld [vmem:[%s0 + $0x78] sm:$0xf]
    %v251 = vld [vmem:[%s0 + $0x7c] sm:$0xf]
    %v252 = vld [vmem:[%s0 + $0x80] sm:$0xf]
    %v253 = vld [vmem:[%s0 + $0x84] sm:$0xf]
    %v254 = vld [vmem:[%s0 + $0x88] sm:$0xf]
    %v255 = vld [vmem:[%s0 + $0x8c] sm:$0xf]
    %v256 = vld [vmem:[%s0 + $0x90] sm:$0xf]
    %v257 = vld [vmem:[%s0 + $0x94] sm:$0xf]
    %v258 = vld [vmem:[%s0 + $0x98] sm:$0xf]
    %v259 = vld [vmem:[%s0 + $0x9c] sm:$0xf]
    %v260 = vld [vmem:[%s0 + $0xa0] sm:$0xf]
    %v261 = vld [vmem:[%s0 + $0xa4] sm:$0xf]
    %v262 = vld [vmem:[%s0 + $0xa8] sm:$0xf]
    %v263 = vld [vmem:[%s0 + $0xac] sm:$0xf]
    %v264 = vld [vmem:[%s0 + $0xb0] sm:$0xf]
    %v265 = vld [vmem:[%s0 + $0xb4] sm:$0xf]
    %v266 = vld [vmem:[%s0 + $0xb8] sm:$0xf]
    %v267 = vld [vmem:[%s0 + $0xbc] sm:$0xf]
    %v268 = vld [vmem:[%s0 + $0xc0] sm:$0xf]
    %v269 = vld [vmem:[%s0 + $0xc4] sm:$0xf]
    %v270 = vld [vmem:[%s0 + $0xc8] sm:$0xf]
    %v271 = vld [vmem:[%s0 + $0xcc] sm:$0xf]
    %v272 = vld [vmem:[%s0 + $0xd0] sm:$0xf]
    %v273 = vld [vmem:[%s0 + $0xd4] sm:$0xf]
    %v274 = vld [vmem:[%s0 + $0xd8] sm:$0xf]
    %v275 = vld [vmem:[%s0 + $0xdc] sm:$0xf]
    %v276 = vld [vmem:[%s0 + $0xe0] sm:$0xf]
    %v277 = vld [vmem:[%s0 + $0xe4] sm:$0xf]
    %v278 = vld [vmem:[%s0 + $0xe8] sm:$0xf]
    %v279 = vld [vmem:[%s0 + $0xec] sm:$0xf]
    %v280 = vld [vmem:[%s0 + $0xf0] sm:$0xf]
    %v281 = vld [vmem:[%s0 + $0xf4] sm:$0xf]
    %v282 = vld [vmem:[%s0 + $0xf8] sm:$0xf]
    %v283 = vld [vmem:[%s0 + $0xfc] sm:$0xf]
    %v284 = vld [vmem:[%s0 + $0x100] sm:$0xf]
    %v285 = vld [vmem:[%s0 + $0x104] sm:$0xf]
    %v286 = vld [vmem:[%s0 + $0x108] sm:$0xf]
    %v287 = vld [vmem:[%s0 + $0x10c] sm:$0xf]
    %v288 = vld [vmem:[%s0 + $0x110] sm:$0xf]
    %v289 = vld [vmem:[%s0 + $0x114] sm:$0xf]
    %v290 = vld [vmem:[%s0 + $0x118] sm:$0xf]
    %v291 = vld [vmem:[%s0 + $0x11c] sm:$0xf]
    %v292 = vld [vmem:[%s0 + $0x120] sm:$0xf]
    %v293 = vld [vmem:[%s0 + $0x124] sm:$0xf]
    %v294 = vld [vmem:[%s0 + $0x128] sm:$0xf]
    %v295 = vld [vmem:[%s0 + $0x12c] sm:$0xf]
    %v296 = vld [vmem:[%s0 + $0x130] sm:$0xf]
    %v297 = vld [vmem:[%s0 + $0x134] sm:$0xf]
    %v298 = vld [vmem:[%s0 + $0x138] sm:$0xf]
    %v299 = vld [vmem:[%s0 + $0x13c] sm:$0xf]
    %v300 = vld [vmem:[%s0 + $0x140] sm:$0xf]
    %v301 = vld [vmem:[%s0 + $0x144] sm:$0xf]
    %v302 = vld [vmem:[%s0 + $0x148] sm:$0xf]
    %v303 = vld [vmem:[%s0 + $0x14c] sm:$0xf]
    %v304 = vld [vmem:[%s0 + $0x150] sm:$0xf]
    %v305 = vld [vmem:[%s0 + $0x154] sm:$0xf]
    %v306 = vld [vmem:[%s0 + $0x158] sm:$0xf]
    %v307 = vld [vmem:[%s0 + $0x15c] sm:$0xf]
    %v308 = vld [vmem:[%s0 + $0x160] sm:$0xf]
    %v309 = vld [vmem:[%s0 + $0x164] sm:$0xf]
    %v310 = vld [vmem:[%s0 + $0x168] sm:$0xf]
    %v311 = vld [vmem:[%s0 + $0x16c] sm:$0xf]
    %v312 = vld [vmem:[%s0 + $0x170] sm:$0xf]
    %v313 = vld [vmem:[%s0 + $0x174] sm:$0xf]
    %v314 = vld [vmem:[%s0 + $0x178] sm:$0xf]
    %v315 = vld [vmem:[%s0 + $0x17c] sm:$0xf]
    %v316 = vld [vmem:[%s0 + $0x180] sm:$0xf]
    %v317 = vld [vmem:[%s0 + $0x184] sm:$0xf]
    %v318 = vld [vmem:[%s0 + $0x188] sm:$0xf]
    %v319 = vld [vmem:[%s0 + $0x18c] sm:$0xf]
    %v320 = vld [vmem:[%s1] sm:$0xf]
    %v321 = vld [vmem:[%s1 + $0x4] sm:$0xf]
    %v322 = vld [vmem:[%s1 + $0x8] sm:$0xf]
    %v323 = vld [vmem:[%s1 + $0xc] sm:$0xf]
    %v324 = vld [vmem:[%s1 + $0x10] sm:$0xf]
    %v325 = vld [vmem:[%s1 + $0x14] sm:$0xf]
    %v426 = vunpack.c.l.b16 %v220
    %v427 = vunpack.c.l.b16 %v221
    %v428 = vunpack.c.l.b16 %v222
    %v429 = vunpack.c.l.b16 %v223
    %v430 = vunpack.c.l.b16 %v224
    %v431 = vunpack.c.l.b16 %v225
    %v432 = vunpack.c.l.b16 %v226
    %v433 = vunpack.c.l.b16 %v227
    %v434 = vunpack.c.l.b16 %v228
    %v435 = vunpack.c.l.b16 %v229
    %v436 = vunpack.c.l.b16 %v230
    %v437 = vunpack.c.l.b16 %v231
    %v438 = vunpack.c.l.b16 %v232
    %v439 = vunpack.c.l.b16 %v233
    %v440 = vunpack.c.l.b16 %v234
    %v441 = vunpack.c.l.b16 %v235
    %v442 = vunpack.c.l.b16 %v236
    %v443 = vunpack.c.l.b16 %v237
    %v444 = vunpack.c.l.b16 %v238
    %v445 = vunpack.c.l.b16 %v239
    %v446 = vunpack.c.l.b16 %v240
    %v447 = vunpack.c.l.b16 %v241
    %v448 = vunpack.c.l.b16 %v242
    %v449 = vunpack.c.l.b16 %v243
    %v450 = vunpack.c.l.b16 %v244
    %v451 = vunpack.c.l.b16 %v245
    %v452 = vunpack.c.l.b16 %v246
    %v453 = vunpack.c.l.b16 %v247
    %v454 = vunpack.c.l.b16 %v248
    %v455 = vunpack.c.l.b16 %v249
    %v456 = vunpack.c.l.b16 %v250
    %v457 = vunpack.c.l.b16 %v251
    %v458 = vunpack.c.l.b16 %v252
    %v459 = vunpack.c.l.b16 %v253
    %v460 = vunpack.c.l.b16 %v254
    %v461 = vunpack.c.l.b16 %v255
    %v462 = vunpack.c.l.b16 %v256
    %v463 = vunpack.c.l.b16 %v257
    %v464 = vunpack.c.l.b16 %v258
    %v465 = vunpack.c.l.b16 %v259
    %v466 = vunpack.c.l.b16 %v260
    %v467 = vunpack.c.l.b16 %v261
    %v468 = vunpack.c.l.b16 %v262
    %v469 = vunpack.c.l.b16 %v263
    %v470 = vunpack.c.l.b16 %v264
    %v471 = vunpack.c.l.b16 %v265
    %v472 = vunpack.c.l.b16 %v266
    %v473 = vunpack.c.l.b16 %v267
    %v474 = vunpack.c.l.b16 %v268
    %v475 = vunpack.c.l.b16 %v269
    %v476 = vunpack.c.l.b16 %v270
    %v477 = vunpack.c.l.b16 %v271
    %v478 = vunpack.c.l.b16 %v272
    %v479 = vunpack.c.l.b16 %v273
    %v480 = vunpack.c.l.b16 %v274
    %v481 = vunpack.c.l.b16 %v275
    %v482 = vunpack.c.l.b16 %v276
    %v483 = vunpack.c.l.b16 %v277
    %v484 = vunpack.c.l.b16 %v278
    %v485 = vunpack.c.l.b16 %v279
    %v486 = vunpack.c.l.b16 %v280
    %v487 = vunpack.c.l.b16 %v281
    %v488 = vunpack.c.l.b16 %v282
    %v489 = vunpack.c.l.b16 %v283
    %v490 = vunpack.c.l.b16 %v284
    %v491 = vunpack.c.l.b16 %v285
    %v492 = vunpack.c.l.b16 %v286
    %v493 = vunpack.c.l.b16 %v287
    %v494 = vunpack.c.l.b16 %v288
    %v495 = vunpack.c.l.b16 %v289
    %v496 = vunpack.c.l.b16 %v290
    %v497 = vunpack.c.l.b16 %v291
    %v498 = vunpack.c.l.b16 %v292
    %v499 = vunpack.c.l.b16 %v293
    %v500 = vunpack.c.l.b16 %v294
    %v501 = vunpack.c.l.b16 %v295
    %v502 = vunpack.c.l.b16 %v296
    %v503 = vunpack.c.l.b16 %v297
    %v504 = vunpack.c.l.b16 %v298
    %v505 = vunpack.c.l.b16 %v299
    %v506 = vunpack.c.l.b16 %v300
    %v507 = vunpack.c.l.b16 %v301
    %v508 = vunpack.c.l.b16 %v302
    %v509 = vunpack.c.l.b16 %v303
    %v510 = vunpack.c.l.b16 %v304
    %v511 = vunpack.c.l.b16 %v305
    %v512 = vunpack.c.l.b16 %v306
    %v513 = vunpack.c.l.b16 %v307
    %v514 = vunpack.c.l.b16 %v308
    %v515 = vunpack.c.l.b16 %v309
    %v516 = vunpack.c.l.b16 %v310
    %v517 = vunpack.c.l.b16 %v311
    %v518 = vunpack.c.l.b16 %v312
    %v519 = vunpack.c.l.b16 %v313
    %v520 = vunpack.c.l.b16 %v314
    %v521 = vunpack.c.l.b16 %v315
    %v522 = vunpack.c.l.b16 %v316
    %v523 = vunpack.c.l.b16 %v317
    %v524 = vunpack.c.l.b16 %v318
    %v525 = vunpack.c.l.b16 %v319
    %v526 = vpack.c.b16 %v427, %v426
    %v527 = vpack.c.b16 %v429, %v428
    %v528 = vpack.c.b16 %v431, %v430
    %v529 = vpack.c.b16 %v433, %v432
    %v530 = vpack.c.b16 %v435, %v434
    %v531 = vpack.c.b16 %v437, %v436
    %v532 = vpack.c.b16 %v439, %v438
    %v533 = vpack.c.b16 %v441, %v440
    %v534 = vpack.c.b16 %v443, %v442
    %v535 = vpack.c.b16 %v445, %v444
    %v536 = vpack.c.b16 %v447, %v446
    %v537 = vpack.c.b16 %v449, %v448
    %v538 = vpack.c.b16 %v451, %v450
    %v539 = vpack.c.b16 %v453, %v452
    %v540 = vpack.c.b16 %v455, %v454
    %v541 = vpack.c.b16 %v457, %v456
    %v542 = vpack.c.b16 %v459, %v458
    %v543 = vpack.c.b16 %v461, %v460
    %v544 = vpack.c.b16 %v463, %v462
    %v545 = vpack.c.b16 %v465, %v464
    %v546 = vpack.c.b16 %v467, %v466
    %v547 = vpack.c.b16 %v469, %v468
    %v548 = vpack.c.b16 %v471, %v470
    %v549 = vpack.c.b16 %v473, %v472
    %v550 = vpack.c.b16 %v475, %v474
    %v551 = vpack.c.b16 %v477, %v476
    %v552 = vpack.c.b16 %v479, %v478
    %v553 = vpack.c.b16 %v481, %v480
    %v554 = vpack.c.b16 %v483, %v482
    %v555 = vpack.c.b16 %v485, %v484
    %v556 = vpack.c.b16 %v487, %v486
    %v557 = vpack.c.b16 %v489, %v488
    %v558 = vpack.c.b16 %v491, %v490
    %v559 = vpack.c.b16 %v493, %v492
    %v560 = vpack.c.b16 %v495, %v494
    %v561 = vpack.c.b16 %v497, %v496
    %v562 = vpack.c.b16 %v499, %v498
    %v563 = vpack.c.b16 %v501, %v500
    %v564 = vpack.c.b16 %v503, %v502
    %v565 = vpack.c.b16 %v505, %v504
    %v566 = vpack.c.b16 %v507, %v506
    %v567 = vpack.c.b16 %v509, %v508
    %v568 = vpack.c.b16 %v511, %v510
    %v569 = vpack.c.b16 %v513, %v512
    %v570 = vpack.c.b16 %v515, %v514
    %v571 = vpack.c.b16 %v517, %v516
    %v572 = vpack.c.b16 %v519, %v518
    %v573 = vpack.c.b16 %v521, %v520
    %v574 = vpack.c.b16 %v523, %v522
    %v575 = vpack.c.b16 %v525, %v524
    %v582 = vunpack.c.l.b16 %v320
    %v583 = vunpack.c.l.b16 %v321
    %v584 = vunpack.c.l.b16 %v322
    %v585 = vunpack.c.l.b16 %v323
    %v586 = vunpack.c.l.b16 %v324
    %v587 = vunpack.c.l.b16 %v325
    %v588 = vpack.c.b16 %v583, %v582
    %v589 = vpack.c.b16 %v585, %v584
    %v590 = vpack.c.b16 %v587, %v586
    %vm594 = vcmask 392192
    %v596 = vsel %vm594, %v526, 0
    %v599 = vsel %vm594, %v527, 0
    %v602 = vsel %vm594, %v528, 0
    %v605 = vsel %vm594, %v529, 0
    %v608 = vsel %vm594, %v530, 0
    %v611 = vsel %vm594, %v531, 0
    %v614 = vsel %vm594, %v532, 0
    %v617 = vsel %vm594, %v533, 0
    %v620 = vsel %vm594, %v534, 0
    %v623 = vsel %vm594, %v535, 0
    %v626 = vsel %vm594, %v536, 0
    %v629 = vsel %vm594, %v537, 0
    %v632 = vsel %vm594, %v538, 0
    %v635 = vsel %vm594, %v539, 0
    %v638 = vsel %vm594, %v540, 0
    %v641 = vsel %vm594, %v541, 0
    %v644 = vsel %vm594, %v542, 0
    %v647 = vsel %vm594, %v543, 0
    %v650 = vsel %vm594, %v544, 0
    %v653 = vsel %vm594, %v545, 0
    %v656 = vsel %vm594, %v546, 0
    %v659 = vsel %vm594, %v547, 0
    %v662 = vsel %vm594, %v548, 0
    %v665 = vsel %vm594, %v549, 0
    %v668 = vsel %vm594, %v550, 0
    %v671 = vsel %vm594, %v551, 0
    %v674 = vsel %vm594, %v552, 0
    %v677 = vsel %vm594, %v553, 0
    %v680 = vsel %vm594, %v554, 0
    %v683 = vsel %vm594, %v555, 0
    %v686 = vsel %vm594, %v556, 0
    %v689 = vsel %vm594, %v557, 0
    %v692 = vsel %vm594, %v558, 0
    %v695 = vsel %vm594, %v559, 0
    %v698 = vsel %vm594, %v560, 0
    %v701 = vsel %vm594, %v561, 0
    %v704 = vsel %vm594, %v562, 0
    %v707 = vsel %vm594, %v563, 0
    %v710 = vsel %vm594, %v564, 0
    %v713 = vsel %vm594, %v565, 0
    %v716 = vsel %vm594, %v566, 0
    %v719 = vsel %vm594, %v567, 0
    %v722 = vsel %vm594, %v568, 0
    %v725 = vsel %vm594, %v569, 0
    %v728 = vsel %vm594, %v570, 0
    %v731 = vsel %vm594, %v571, 0
    %v734 = vsel %vm594, %v572, 0
    %v737 = vsel %vm594, %v573, 0
    %v740 = vsel %vm594, %v574, 0
    %v743 = vsel %vm594, %v575, 0
    %745 = vmatpush.bf16.msra.mxu0 0
    %746 = vmatpush.bf16.msra.mxu0 0
    %747 = vmatpush.bf16.msra.mxu0 0
    %748 = vmatpush.bf16.msra.mxu0 0
    %749 = vmatpush.bf16.msra.mxu0 0
    %750 = vmatpush.bf16.msra.mxu0 %v590
    %751 = vmatpush.bf16.msra.mxu0 %v589
    %752 = vmatpush.bf16.msra.mxu0 %v588
    %753 = vmatmul.bf16.gmra.mxu0 %v596
    %v754 = vpop.f32.mrf.mxu0
    %v755 = vadd.f32 0.0, %v754
    %v756 = vpop.f32.mrf.mxu0
    %v757 = vadd.f32 0.0, %v756
    %758 = vmatmul.bf16.gmra.mxu0 %v599
    %v759 = vpop.f32.mrf.mxu0
    %v760 = vadd.f32 0.0, %v759
    %v761 = vpop.f32.mrf.mxu0
    %v762 = vadd.f32 0.0, %v761
    %763 = vmatmul.bf16.gmra.mxu0 %v602
    %v764 = vpop.f32.mrf.mxu0
    %v765 = vadd.f32 0.0, %v764
    %v766 = vpop.f32.mrf.mxu0
    %v767 = vadd.f32 0.0, %v766
    %768 = vmatmul.bf16.gmra.mxu0 %v605
    %v769 = vpop.f32.mrf.mxu0
    %v770 = vadd.f32 0.0, %v769
    %v771 = vpop.f32.mrf.mxu0
    %v772 = vadd.f32 0.0, %v771
    %773 = vmatmul.bf16.gmra.mxu0 %v608
    %v774 = vpop.f32.mrf.mxu0
    %v775 = vadd.f32 0.0, %v774
    %v776 = vpop.f32.mrf.mxu0
    %v777 = vadd.f32 0.0, %v776
    %778 = vmatmul.bf16.gmra.mxu0 %v611
    %v779 = vpop.f32.mrf.mxu0
    %v780 = vadd.f32 0.0, %v779
    %v781 = vpop.f32.mrf.mxu0
    %v782 = vadd.f32 0.0, %v781
    %783 = vmatmul.bf16.gmra.mxu0 %v614
    %v784 = vpop.f32.mrf.mxu0
    %v785 = vadd.f32 0.0, %v784
    %v786 = vpop.f32.mrf.mxu0
    %v787 = vadd.f32 0.0, %v786
    %788 = vmatmul.bf16.gmra.mxu0 %v617
    %v789 = vpop.f32.mrf.mxu0
    %v790 = vadd.f32 0.0, %v789
    %v791 = vpop.f32.mrf.mxu0
    %v792 = vadd.f32 0.0, %v791
    %793 = vmatmul.bf16.gmra.mxu0 %v620
    %v794 = vpop.f32.mrf.mxu0
    %v795 = vadd.f32 0.0, %v794
    %v796 = vpop.f32.mrf.mxu0
    %v797 = vadd.f32 0.0, %v796
    %798 = vmatmul.bf16.gmra.mxu0 %v623
    %v799 = vpop.f32.mrf.mxu0
    %v800 = vadd.f32 0.0, %v799
    %v801 = vpop.f32.mrf.mxu0
    %v802 = vadd.f32 0.0, %v801
    %803 = vmatmul.bf16.gmra.mxu0 %v626
    %v804 = vpop.f32.mrf.mxu0
    %v805 = vadd.f32 0.0, %v804
    %v806 = vpop.f32.mrf.mxu0
    %v807 = vadd.f32 0.0, %v806
    %808 = vmatmul.bf16.gmra.mxu0 %v629
    %v809 = vpop.f32.mrf.mxu0
    %v810 = vadd.f32 0.0, %v809
    %v811 = vpop.f32.mrf.mxu0
    %v812 = vadd.f32 0.0, %v811
    %813 = vmatmul.bf16.gmra.mxu0 %v632
    %v814 = vpop.f32.mrf.mxu0
    %v815 = vadd.f32 0.0, %v814
    %v816 = vpop.f32.mrf.mxu0
    %v817 = vadd.f32 0.0, %v816
    %818 = vmatmul.bf16.gmra.mxu0 %v635
    %v819 = vpop.f32.mrf.mxu0
    %v820 = vadd.f32 0.0, %v819
    %v821 = vpop.f32.mrf.mxu0
    %v822 = vadd.f32 0.0, %v821
    %823 = vmatmul.bf16.gmra.mxu0 %v638
    %v824 = vpop.f32.mrf.mxu0
    %v825 = vadd.f32 0.0, %v824
    %v826 = vpop.f32.mrf.mxu0
    %v827 = vadd.f32 0.0, %v826
    %828 = vmatmul.bf16.gmra.mxu0 %v641
    %v829 = vpop.f32.mrf.mxu0
    %v830 = vadd.f32 0.0, %v829
    %v831 = vpop.f32.mrf.mxu0
    %v832 = vadd.f32 0.0, %v831
    %833 = vmatmul.bf16.gmra.mxu0 %v644
    %v834 = vpop.f32.mrf.mxu0
    %v835 = vadd.f32 0.0, %v834
    %v836 = vpop.f32.mrf.mxu0
    %v837 = vadd.f32 0.0, %v836
    %838 = vmatmul.bf16.gmra.mxu0 %v647
    %v839 = vpop.f32.mrf.mxu0
    %v840 = vadd.f32 0.0, %v839
    %v841 = vpop.f32.mrf.mxu0
    %v842 = vadd.f32 0.0, %v841
    %843 = vmatmul.bf16.gmra.mxu0 %v650
    %v844 = vpop.f32.mrf.mxu0
    %v845 = vadd.f32 0.0, %v844
    %v846 = vpop.f32.mrf.mxu0
    %v847 = vadd.f32 0.0, %v846
    %848 = vmatmul.bf16.gmra.mxu0 %v653
    %v849 = vpop.f32.mrf.mxu0
    %v850 = vadd.f32 0.0, %v849
    %v851 = vpop.f32.mrf.mxu0
    %v852 = vadd.f32 0.0, %v851
    %853 = vmatmul.bf16.gmra.mxu0 %v656
    %v854 = vpop.f32.mrf.mxu0
    %v855 = vadd.f32 0.0, %v854
    %v856 = vpop.f32.mrf.mxu0
    %v857 = vadd.f32 0.0, %v856
    %858 = vmatmul.bf16.gmra.mxu0 %v659
    %v859 = vpop.f32.mrf.mxu0
    %v860 = vadd.f32 0.0, %v859
    %v861 = vpop.f32.mrf.mxu0
    %v862 = vadd.f32 0.0, %v861
    %863 = vmatmul.bf16.gmra.mxu0 %v662
    %v864 = vpop.f32.mrf.mxu0
    %v865 = vadd.f32 0.0, %v864
    %v866 = vpop.f32.mrf.mxu0
    %v867 = vadd.f32 0.0, %v866
    %868 = vmatmul.bf16.gmra.mxu0 %v665
    %v869 = vpop.f32.mrf.mxu0
    %v870 = vadd.f32 0.0, %v869
    %v871 = vpop.f32.mrf.mxu0
    %v872 = vadd.f32 0.0, %v871
    %873 = vmatmul.bf16.gmra.mxu0 %v668
    %v874 = vpop.f32.mrf.mxu0
    %v875 = vadd.f32 0.0, %v874
    %v876 = vpop.f32.mrf.mxu0
    %v877 = vadd.f32 0.0, %v876
    %878 = vmatmul.bf16.gmra.mxu0 %v671
    %v879 = vpop.f32.mrf.mxu0
    %v880 = vadd.f32 0.0, %v879
    %v881 = vpop.f32.mrf.mxu0
    %v882 = vadd.f32 0.0, %v881
    %883 = vmatmul.bf16.gmra.mxu0 %v674
    %v884 = vpop.f32.mrf.mxu0
    %v885 = vadd.f32 0.0, %v884
    %v886 = vpop.f32.mrf.mxu0
    %v887 = vadd.f32 0.0, %v886
    %888 = vmatmul.bf16.gmra.mxu0 %v677
    %v889 = vpop.f32.mrf.mxu0
    %v890 = vadd.f32 0.0, %v889
    %v891 = vpop.f32.mrf.mxu0
    %v892 = vadd.f32 0.0, %v891
    %893 = vmatmul.bf16.gmra.mxu0 %v680
    %v894 = vpop.f32.mrf.mxu0
    %v895 = vadd.f32 0.0, %v894
    %v896 = vpop.f32.mrf.mxu0
    %v897 = vadd.f32 0.0, %v896
    %898 = vmatmul.bf16.gmra.mxu0 %v683
    %v899 = vpop.f32.mrf.mxu0
    %v900 = vadd.f32 0.0, %v899
    %v901 = vpop.f32.mrf.mxu0
    %v902 = vadd.f32 0.0, %v901
    %903 = vmatmul.bf16.gmra.mxu0 %v686
    %v904 = vpop.f32.mrf.mxu0
    %v905 = vadd.f32 0.0, %v904
    %v906 = vpop.f32.mrf.mxu0
    %v907 = vadd.f32 0.0, %v906
    %908 = vmatmul.bf16.gmra.mxu0 %v689
    %v909 = vpop.f32.mrf.mxu0
    %v910 = vadd.f32 0.0, %v909
    %v911 = vpop.f32.mrf.mxu0
    %v912 = vadd.f32 0.0, %v911
    %913 = vmatmul.bf16.gmra.mxu0 %v692
    %v914 = vpop.f32.mrf.mxu0
    %v915 = vadd.f32 0.0, %v914
    %v916 = vpop.f32.mrf.mxu0
    %v917 = vadd.f32 0.0, %v916
    %918 = vmatmul.bf16.gmra.mxu0 %v695
    %v919 = vpop.f32.mrf.mxu0
    %v920 = vadd.f32 0.0, %v919
    %v921 = vpop.f32.mrf.mxu0
    %v922 = vadd.f32 0.0, %v921
    %923 = vmatmul.bf16.gmra.mxu0 %v698
    %v924 = vpop.f32.mrf.mxu0
    %v925 = vadd.f32 0.0, %v924
    %v926 = vpop.f32.mrf.mxu0
    %v927 = vadd.f32 0.0, %v926
    %928 = vmatmul.bf16.gmra.mxu0 %v701
    %v929 = vpop.f32.mrf.mxu0
    %v930 = vadd.f32 0.0, %v929
    %v931 = vpop.f32.mrf.mxu0
    %v932 = vadd.f32 0.0, %v931
    %933 = vmatmul.bf16.gmra.mxu0 %v704
    %v934 = vpop.f32.mrf.mxu0
    %v935 = vadd.f32 0.0, %v934
    %v936 = vpop.f32.mrf.mxu0
    %v937 = vadd.f32 0.0, %v936
    %938 = vmatmul.bf16.gmra.mxu0 %v707
    %v939 = vpop.f32.mrf.mxu0
    %v940 = vadd.f32 0.0, %v939
    %v941 = vpop.f32.mrf.mxu0
    %v942 = vadd.f32 0.0, %v941
    %943 = vmatmul.bf16.gmra.mxu0 %v710
    %v944 = vpop.f32.mrf.mxu0
    %v945 = vadd.f32 0.0, %v944
    %v946 = vpop.f32.mrf.mxu0
    %v947 = vadd.f32 0.0, %v946
    %948 = vmatmul.bf16.gmra.mxu0 %v713
    %v949 = vpop.f32.mrf.mxu0
    %v950 = vadd.f32 0.0, %v949
    %v951 = vpop.f32.mrf.mxu0
    %v952 = vadd.f32 0.0, %v951
    %953 = vmatmul.bf16.gmra.mxu0 %v716
    %v954 = vpop.f32.mrf.mxu0
    %v955 = vadd.f32 0.0, %v954
    %v956 = vpop.f32.mrf.mxu0
    %v957 = vadd.f32 0.0, %v956
    %958 = vmatmul.bf16.gmra.mxu0 %v719
    %v959 = vpop.f32.mrf.mxu0
    %v960 = vadd.f32 0.0, %v959
    %v961 = vpop.f32.mrf.mxu0
    %v962 = vadd.f32 0.0, %v961
    %963 = vmatmul.bf16.gmra.mxu0 %v722
    %v964 = vpop.f32.mrf.mxu0
    %v965 = vadd.f32 0.0, %v964
    %v966 = vpop.f32.mrf.mxu0
    %v967 = vadd.f32 0.0, %v966
    %968 = vmatmul.bf16.gmra.mxu0 %v725
    %v969 = vpop.f32.mrf.mxu0
    %v970 = vadd.f32 0.0, %v969
    %v971 = vpop.f32.mrf.mxu0
    %v972 = vadd.f32 0.0, %v971
    %973 = vmatmul.bf16.gmra.mxu0 %v728
    %v974 = vpop.f32.mrf.mxu0
    %v975 = vadd.f32 0.0, %v974
    %v976 = vpop.f32.mrf.mxu0
    %v977 = vadd.f32 0.0, %v976
    %978 = vmatmul.bf16.gmra.mxu0 %v731
    %v979 = vpop.f32.mrf.mxu0
    %v980 = vadd.f32 0.0, %v979
    %v981 = vpop.f32.mrf.mxu0
    %v982 = vadd.f32 0.0, %v981
    %983 = vmatmul.bf16.gmra.mxu0 %v734
    %v984 = vpop.f32.mrf.mxu0
    %v985 = vadd.f32 0.0, %v984
    %v986 = vpop.f32.mrf.mxu0
    %v987 = vadd.f32 0.0, %v986
    %988 = vmatmul.bf16.gmra.mxu0 %v737
    %v989 = vpop.f32.mrf.mxu0
    %v990 = vadd.f32 0.0, %v989
    %v991 = vpop.f32.mrf.mxu0
    %v992 = vadd.f32 0.0, %v991
    %993 = vmatmul.bf16.gmra.mxu0 %v740
    %v994 = vpop.f32.mrf.mxu0
    %v995 = vadd.f32 0.0, %v994
    %v996 = vpop.f32.mrf.mxu0
    %v997 = vadd.f32 0.0, %v996
    %998 = vmatmul.bf16.gmra.mxu0 %v743
    %v999 = vpop.f32.mrf.mxu0
    %v1000 = vadd.f32 0.0, %v999
    %v1001 = vpop.f32.mrf.mxu0
    %v1002 = vadd.f32 0.0, %v1001
    %1003 = vdwg.mxu0
    %v1004 = vadd.f32 %v120, %v755
    %v1005 = vadd.f32 %v121, %v757
    %v1006 = vadd.f32 %v122, %v760
    %v1007 = vadd.f32 %v123, %v762
    %v1008 = vadd.f32 %v124, %v765
    %v1009 = vadd.f32 %v125, %v767
    %v1010 = vadd.f32 %v126, %v770
    %v1011 = vadd.f32 %v127, %v772
    %v1012 = vadd.f32 %v128, %v775
    %v1013 = vadd.f32 %v129, %v777
    %v1014 = vadd.f32 %v130, %v780
    %v1015 = vadd.f32 %v131, %v782
    %v1016 = vadd.f32 %v132, %v785
    %v1017 = vadd.f32 %v133, %v787
    %v1018 = vadd.f32 %v134, %v790
    %v1019 = vadd.f32 %v135, %v792
    %v1020 = vadd.f32 %v136, %v795
    %v1021 = vadd.f32 %v137, %v797
    %v1022 = vadd.f32 %v138, %v800
    %v1023 = vadd.f32 %v139, %v802
    %v1024 = vadd.f32 %v140, %v805
    %v1025 = vadd.f32 %v141, %v807
    %v1026 = vadd.f32 %v142, %v810
    %v1027 = vadd.f32 %v143, %v812
    %v1028 = vadd.f32 %v144, %v815
    %v1029 = vadd.f32 %v145, %v817
    %v1030 = vadd.f32 %v146, %v820
    %v1031 = vadd.f32 %v147, %v822
    %v1032 = vadd.f32 %v148, %v825
    %v1033 = vadd.f32 %v149, %v827
    %v1034 = vadd.f32 %v150, %v830
    %v1035 = vadd.f32 %v151, %v832
    %v1036 = vadd.f32 %v152, %v835
    %v1037 = vadd.f32 %v153, %v837
    %v1038 = vadd.f32 %v154, %v840
    %v1039 = vadd.f32 %v155, %v842
    %v1040 = vadd.f32 %v156, %v845
    %v1041 = vadd.f32 %v157, %v847
    %v1042 = vadd.f32 %v158, %v850
    %v1043 = vadd.f32 %v159, %v852
    %v1044 = vadd.f32 %v160, %v855
    %v1045 = vadd.f32 %v161, %v857
    %v1046 = vadd.f32 %v162, %v860
    %v1047 = vadd.f32 %v163, %v862
    %v1048 = vadd.f32 %v164, %v865
    %v1049 = vadd.f32 %v165, %v867
    %v1050 = vadd.f32 %v166, %v870
    %v1051 = vadd.f32 %v167, %v872
    %v1052 = vadd.f32 %v168, %v875
    %v1053 = vadd.f32 %v169, %v877
    %v1054 = vadd.f32 %v170, %v880
    %v1055 = vadd.f32 %v171, %v882
    %v1056 = vadd.f32 %v172, %v885
    %v1057 = vadd.f32 %v173, %v887
    %v1058 = vadd.f32 %v174, %v890
    %v1059 = vadd.f32 %v175, %v892
    %v1060 = vadd.f32 %v176, %v895
    %v1061 = vadd.f32 %v177, %v897
    %v1062 = vadd.f32 %v178, %v900
    %v1063 = vadd.f32 %v179, %v902
    %v1064 = vadd.f32 %v180, %v905
    %v1065 = vadd.f32 %v181, %v907
    %v1066 = vadd.f32 %v182, %v910
    %v1067 = vadd.f32 %v183, %v912
    %v1068 = vadd.f32 %v184, %v915
    %v1069 = vadd.f32 %v185, %v917
    %v1070 = vadd.f32 %v186, %v920
    %v1071 = vadd.f32 %v187, %v922
    %v1072 = vadd.f32 %v188, %v925
    %v1073 = vadd.f32 %v189, %v927
    %v1074 = vadd.f32 %v190, %v930
    %v1075 = vadd.f32 %v191, %v932
    %v1076 = vadd.f32 %v192, %v935
    %v1077 = vadd.f32 %v193, %v937
    %v1078 = vadd.f32 %v194, %v940
    %v1079 = vadd.f32 %v195, %v942
    %v1080 = vadd.f32 %v196, %v945
    %v1081 = vadd.f32 %v197, %v947
    %v1082 = vadd.f32 %v198, %v950
    %v1083 = vadd.f32 %v199, %v952
    %v1084 = vadd.f32 %v200, %v955
    %v1085 = vadd.f32 %v201, %v957
    %v1086 = vadd.f32 %v202, %v960
    %v1087 = vadd.f32 %v203, %v962
    %v1088 = vadd.f32 %v204, %v965
    %v1089 = vadd.f32 %v205, %v967
    %v1090 = vadd.f32 %v206, %v970
    %v1091 = vadd.f32 %v207, %v972
    %v1092 = vadd.f32 %v208, %v975
    %v1093 = vadd.f32 %v209, %v977
    %v1094 = vadd.f32 %v210, %v980
    %v1095 = vadd.f32 %v211, %v982
    %v1096 = vadd.f32 %v212, %v985
    %v1097 = vadd.f32 %v213, %v987
    %v1098 = vadd.f32 %v214, %v990
    %v1099 = vadd.f32 %v215, %v992
    %v1100 = vadd.f32 %v216, %v995
    %v1101 = vadd.f32 %v217, %v997
    %v1102 = vadd.f32 %v218, %v1000
    %v1103 = vadd.f32 %v219, %v1002
    %1104 = vst [vmem:[#allocation2] sm:$0xff] %v1004
    %1105 = vst [vmem:[#allocation2 + $0x8] sm:$0xff] %v1005
    %1106 = vst [vmem:[#allocation2 + $0x10] sm:$0xff] %v1006
    %1107 = vst [vmem:[#allocation2 + $0x18] sm:$0xff] %v1007
    %1108 = vst [vmem:[#allocation2 + $0x20] sm:$0xff] %v1008
    %1109 = vst [vmem:[#allocation2 + $0x28] sm:$0xff] %v1009
    %1110 = vst [vmem:[#allocation2 + $0x30] sm:$0xff] %v1010
    %1111 = vst [vmem:[#allocation2 + $0x38] sm:$0xff] %v1011
    %1112 = vst [vmem:[#allocation2 + $0x40] sm:$0xff] %v1012
    %1113 = vst [vmem:[#allocation2 + $0x48] sm:$0xff] %v1013
    %1114 = vst [vmem:[#allocation2 + $0x50] sm:$0xff] %v1014
    %1115 = vst [vmem:[#allocation2 + $0x58] sm:$0xff] %v1015
    %1116 = vst [vmem:[#allocation2 + $0x60] sm:$0xff] %v1016
    %1117 = vst [vmem:[#allocation2 + $0x68] sm:$0xff] %v1017
    %1118 = vst [vmem:[#allocation2 + $0x70] sm:$0xff] %v1018
    %1119 = vst [vmem:[#allocation2 + $0x78] sm:$0xff] %v1019
    %1120 = vst [vmem:[#allocation2 + $0x80] sm:$0xff] %v1020
    %1121 = vst [vmem:[#allocation2 + $0x88] sm:$0xff] %v1021
    %1122 = vst [vmem:[#allocation2 + $0x90] sm:$0xff] %v1022
    %1123 = vst [vmem:[#allocation2 + $0x98] sm:$0xff] %v1023
    %1124 = vst [vmem:[#allocation2 + $0xa0] sm:$0xff] %v1024
    %1125 = vst [vmem:[#allocation2 + $0xa8] sm:$0xff] %v1025
    %1126 = vst [vmem:[#allocation2 + $0xb0] sm:$0xff] %v1026
    %1127 = vst [vmem:[#allocation2 + $0xb8] sm:$0xff] %v1027
    %1128 = vst [vmem:[#allocation2 + $0xc0] sm:$0xff] %v1028
    %1129 = vst [vmem:[#allocation2 + $0xc8] sm:$0xff] %v1029
    %1130 = vst [vmem:[#allocation2 + $0xd0] sm:$0xff] %v1030
    %1131 = vst [vmem:[#allocation2 + $0xd8] sm:$0xff] %v1031
    %1132 = vst [vmem:[#allocation2 + $0xe0] sm:$0xff] %v1032
    %1133 = vst [vmem:[#allocation2 + $0xe8] sm:$0xff] %v1033
    %1134 = vst [vmem:[#allocation2 + $0xf0] sm:$0xff] %v1034
    %1135 = vst [vmem:[#allocation2 + $0xf8] sm:$0xff] %v1035
    %1136 = vst [vmem:[#allocation2 + $0x100] sm:$0xff] %v1036
    %1137 = vst [vmem:[#allocation2 + $0x108] sm:$0xff] %v1037
    %1138 = vst [vmem:[#allocation2 + $0x110] sm:$0xff] %v1038
    %1139 = vst [vmem:[#allocation2 + $0x118] sm:$0xff] %v1039
    %1140 = vst [vmem:[#allocation2 + $0x120] sm:$0xff] %v1040
    %1141 = vst [vmem:[#allocation2 + $0x128] sm:$0xff] %v1041
    %1142 = vst [vmem:[#allocation2 + $0x130] sm:$0xff] %v1042
    %1143 = vst [vmem:[#allocation2 + $0x138] sm:$0xff] %v1043
    %1144 = vst [vmem:[#allocation2 + $0x140] sm:$0xff] %v1044
    %1145 = vst [vmem:[#allocation2 + $0x148] sm:$0xff] %v1045
    %1146 = vst [vmem:[#allocation2 + $0x150] sm:$0xff] %v1046
    %1147 = vst [vmem:[#allocation2 + $0x158] sm:$0xff] %v1047
    %1148 = vst [vmem:[#allocation2 + $0x160] sm:$0xff] %v1048
    %1149 = vst [vmem:[#allocation2 + $0x168] sm:$0xff] %v1049
    %1150 = vst [vmem:[#allocation2 + $0x170] sm:$0xff] %v1050
    %1151 = vst [vmem:[#allocation2 + $0x178] sm:$0xff] %v1051
    %1152 = vst [vmem:[#allocation2 + $0x180] sm:$0xff] %v1052
    %1153 = vst [vmem:[#allocation2 + $0x188] sm:$0xff] %v1053
    %1154 = vst [vmem:[#allocation2 + $0x190] sm:$0xff] %v1054
    %1155 = vst [vmem:[#allocation2 + $0x198] sm:$0xff] %v1055
    %1156 = vst [vmem:[#allocation2 + $0x1a0] sm:$0xff] %v1056
    %1157 = vst [vmem:[#allocation2 + $0x1a8] sm:$0xff] %v1057
    %1158 = vst [vmem:[#allocation2 + $0x1b0] sm:$0xff] %v1058
    %1159 = vst [vmem:[#allocation2 + $0x1b8] sm:$0xff] %v1059
    %1160 = vst [vmem:[#allocation2 + $0x1c0] sm:$0xff] %v1060
    %1161 = vst [vmem:[#allocation2 + $0x1c8] sm:$0xff] %v1061
    %1162 = vst [vmem:[#allocation2 + $0x1d0] sm:$0xff] %v1062
    %1163 = vst [vmem:[#allocation2 + $0x1d8] sm:$0xff] %v1063
    %1164 = vst [vmem:[#allocation2 + $0x1e0] sm:$0xff] %v1064
    %1165 = vst [vmem:[#allocation2 + $0x1e8] sm:$0xff] %v1065
    %1166 = vst [vmem:[#allocation2 + $0x1f0] sm:$0xff] %v1066
    %1167 = vst [vmem:[#allocation2 + $0x1f8] sm:$0xff] %v1067
    %1168 = vst [vmem:[#allocation2 + $0x200] sm:$0xff] %v1068
    %1169 = vst [vmem:[#allocation2 + $0x208] sm:$0xff] %v1069
    %1170 = vst [vmem:[#allocation2 + $0x210] sm:$0xff] %v1070
    %1171 = vst [vmem:[#allocation2 + $0x218] sm:$0xff] %v1071
    %1172 = vst [vmem:[#allocation2 + $0x220] sm:$0xff] %v1072
    %1173 = vst [vmem:[#allocation2 + $0x228] sm:$0xff] %v1073
    %1174 = vst [vmem:[#allocation2 + $0x230] sm:$0xff] %v1074
    %1175 = vst [vmem:[#allocation2 + $0x238] sm:$0xff] %v1075
    %1176 = vst [vmem:[#allocation2 + $0x240] sm:$0xff] %v1076
    %1177 = vst [vmem:[#allocation2 + $0x248] sm:$0xff] %v1077
    %1178 = vst [vmem:[#allocation2 + $0x250] sm:$0xff] %v1078
    %1179 = vst [vmem:[#allocation2 + $0x258] sm:$0xff] %v1079
    %1180 = vst [vmem:[#allocation2 + $0x260] sm:$0xff] %v1080
    %1181 = vst [vmem:[#allocation2 + $0x268] sm:$0xff] %v1081
    %1182 = vst [vmem:[#allocation2 + $0x270] sm:$0xff] %v1082
    %1183 = vst [vmem:[#allocation2 + $0x278] sm:$0xff] %v1083
    %1184 = vst [vmem:[#allocation2 + $0x280] sm:$0xff] %v1084
    %1185 = vst [vmem:[#allocation2 + $0x288] sm:$0xff] %v1085
    %1186 = vst [vmem:[#allocation2 + $0x290] sm:$0xff] %v1086
    %1187 = vst [vmem:[#allocation2 + $0x298] sm:$0xff] %v1087
    %1188 = vst [vmem:[#allocation2 + $0x2a0] sm:$0xff] %v1088
    %1189 = vst [vmem:[#allocation2 + $0x2a8] sm:$0xff] %v1089
    %1190 = vst [vmem:[#allocation2 + $0x2b0] sm:$0xff] %v1090
    %1191 = vst [vmem:[#allocation2 + $0x2b8] sm:$0xff] %v1091
    %1192 = vst [vmem:[#allocation2 + $0x2c0] sm:$0xff] %v1092
    %1193 = vst [vmem:[#allocation2 + $0x2c8] sm:$0xff] %v1093
    %1194 = vst [vmem:[#allocation2 + $0x2d0] sm:$0xff] %v1094
    %1195 = vst [vmem:[#allocation2 + $0x2d8] sm:$0xff] %v1095
    %1196 = vst [vmem:[#allocation2 + $0x2e0] sm:$0xff] %v1096
    %1197 = vst [vmem:[#allocation2 + $0x2e8] sm:$0xff] %v1097
    %1198 = vst [vmem:[#allocation2 + $0x2f0] sm:$0xff] %v1098
    %1199 = vst [vmem:[#allocation2 + $0x2f8] sm:$0xff] %v1099
    %1200 = vst [vmem:[#allocation2 + $0x300] sm:$0xff] %v1100
    %1201 = vst [vmem:[#allocation2 + $0x308] sm:$0xff] %v1101
    %1202 = vst [vmem:[#allocation2 + $0x310] sm:$0xff] %v1102
    %1203 = vst [vmem:[#allocation2 + $0x318] sm:$0xff] %v1103
    // Predicated region
    $region18: #{tpu_custom_call.1} parent=1 // pred_check
      %p1204 = pneg %p16
    $region19: #{tpu_custom_call.1} parent=1 // pred_check_branch
      %1206 = sbr.rel (%p1204) target = $region21
    $region20: #{tpu_custom_call.1} parent=1 // pred_region
      %v1207 = vld [vmem:[#allocation2] sm:$0xff]
      %v1208 = vld [vmem:[#allocation2 + $0x8] sm:$0xff]
      %v1209 = vld [vmem:[#allocation2 + $0x10] sm:$0xff]
      %v1210 = vld [vmem:[#allocation2 + $0x18] sm:$0xff]
      %v1211 = vld [vmem:[#allocation2 + $0x20] sm:$0xff]
      %v1212 = vld [vmem:[#allocation2 + $0x28] sm:$0xff]
      %v1213 = vld [vmem:[#allocation2 + $0x30] sm:$0xff]
      %v1214 = vld [vmem:[#allocation2 + $0x38] sm:$0xff]
      %v1215 = vld [vmem:[#allocation2 + $0x40] sm:$0xff]
      %v1216 = vld [vmem:[#allocation2 + $0x48] sm:$0xff]
      %v1217 = vld [vmem:[#allocation2 + $0x50] sm:$0xff]
      %v1218 = vld [vmem:[#allocation2 + $0x58] sm:$0xff]
      %v1219 = vld [vmem:[#allocation2 + $0x60] sm:$0xff]
      %v1220 = vld [vmem:[#allocation2 + $0x68] sm:$0xff]
      %v1221 = vld [vmem:[#allocation2 + $0x70] sm:$0xff]
      %v1222 = vld [vmem:[#allocation2 + $0x78] sm:$0xff]
      %v1223 = vld [vmem:[#allocation2 + $0x80] sm:$0xff]
      %v1224 = vld [vmem:[#allocation2 + $0x88] sm:$0xff]
      %v1225 = vld [vmem:[#allocation2 + $0x90] sm:$0xff]
      %v1226 = vld [vmem:[#allocation2 + $0x98] sm:$0xff]
      %v1227 = vld [vmem:[#allocation2 + $0xa0] sm:$0xff]
      %v1228 = vld [vmem:[#allocation2 + $0xa8] sm:$0xff]
      %v1229 = vld [vmem:[#allocation2 + $0xb0] sm:$0xff]
      %v1230 = vld [vmem:[#allocation2 + $0xb8] sm:$0xff]
      %v1231 = vld [vmem:[#allocation2 + $0xc0] sm:$0xff]
      %v1232 = vld [vmem:[#allocation2 + $0xc8] sm:$0xff]
      %v1233 = vld [vmem:[#allocation2 + $0xd0] sm:$0xff]
      %v1234 = vld [vmem:[#allocation2 + $0xd8] sm:$0xff]
      %v1235 = vld [vmem:[#allocation2 + $0xe0] sm:$0xff]
      %v1236 = vld [vmem:[#allocation2 + $0xe8] sm:$0xff]
      %v1237 = vld [vmem:[#allocation2 + $0xf0] sm:$0xff]
      %v1238 = vld [vmem:[#allocation2 + $0xf8] sm:$0xff]
      %v1239 = vld [vmem:[#allocation2 + $0x100] sm:$0xff]
      %v1240 = vld [vmem:[#allocation2 + $0x108] sm:$0xff]
      %v1241 = vld [vmem:[#allocation2 + $0x110] sm:$0xff]
      %v1242 = vld [vmem:[#allocation2 + $0x118] sm:$0xff]
      %v1243 = vld [vmem:[#allocation2 + $0x120] sm:$0xff]
      %v1244 = vld [vmem:[#allocation2 + $0x128] sm:$0xff]
      %v1245 = vld [vmem:[#allocation2 + $0x130] sm:$0xff]
      %v1246 = vld [vmem:[#allocation2 + $0x138] sm:$0xff]
      %v1247 = vld [vmem:[#allocation2 + $0x140] sm:$0xff]
      %v1248 = vld [vmem:[#allocation2 + $0x148] sm:$0xff]
      %v1249 = vld [vmem:[#allocation2 + $0x150] sm:$0xff]
      %v1250 = vld [vmem:[#allocation2 + $0x158] sm:$0xff]
      %v1251 = vld [vmem:[#allocation2 + $0x160] sm:$0xff]
      %v1252 = vld [vmem:[#allocation2 + $0x168] sm:$0xff]
      %v1253 = vld [vmem:[#allocation2 + $0x170] sm:$0xff]
      %v1254 = vld [vmem:[#allocation2 + $0x178] sm:$0xff]
      %v1255 = vld [vmem:[#allocation2 + $0x180] sm:$0xff]
      %v1256 = vld [vmem:[#allocation2 + $0x188] sm:$0xff]
      %v1257 = vld [vmem:[#allocation2 + $0x190] sm:$0xff]
      %v1258 = vld [vmem:[#allocation2 + $0x198] sm:$0xff]
      %v1259 = vld [vmem:[#allocation2 + $0x1a0] sm:$0xff]
      %v1260 = vld [vmem:[#allocation2 + $0x1a8] sm:$0xff]
      %v1261 = vld [vmem:[#allocation2 + $0x1b0] sm:$0xff]
      %v1262 = vld [vmem:[#allocation2 + $0x1b8] sm:$0xff]
      %v1263 = vld [vmem:[#allocation2 + $0x1c0] sm:$0xff]
      %v1264 = vld [vmem:[#allocation2 + $0x1c8] sm:$0xff]
      %v1265 = vld [vmem:[#allocation2 + $0x1d0] sm:$0xff]
      %v1266 = vld [vmem:[#allocation2 + $0x1d8] sm:$0xff]
      %v1267 = vld [vmem:[#allocation2 + $0x1e0] sm:$0xff]
      %v1268 = vld [vmem:[#allocation2 + $0x1e8] sm:$0xff]
      %v1269 = vld [vmem:[#allocation2 + $0x1f0] sm:$0xff]
      %v1270 = vld [vmem:[#allocation2 + $0x1f8] sm:$0xff]
      %v1271 = vld [vmem:[#allocation2 + $0x200] sm:$0xff]
      %v1272 = vld [vmem:[#allocation2 + $0x208] sm:$0xff]
      %v1273 = vld [vmem:[#allocation2 + $0x210] sm:$0xff]
      %v1274 = vld [vmem:[#allocation2 + $0x218] sm:$0xff]
      %v1275 = vld [vmem:[#allocation2 + $0x220] sm:$0xff]
      %v1276 = vld [vmem:[#allocation2 + $0x228] sm:$0xff]
      %v1277 = vld [vmem:[#allocation2 + $0x230] sm:$0xff]
      %v1278 = vld [vmem:[#allocation2 + $0x238] sm:$0xff]
      %v1279 = vld [vmem:[#allocation2 + $0x240] sm:$0xff]
      %v1280 = vld [vmem:[#allocation2 + $0x248] sm:$0xff]
      %v1281 = vld [vmem:[#allocation2 + $0x250] sm:$0xff]
      %v1282 = vld [vmem:[#allocation2 + $0x258] sm:$0xff]
      %v1283 = vld [vmem:[#allocation2 + $0x260] sm:$0xff]
      %v1284 = vld [vmem:[#allocation2 + $0x268] sm:$0xff]
      %v1285 = vld [vmem:[#allocation2 + $0x270] sm:$0xff]
      %v1286 = vld [vmem:[#allocation2 + $0x278] sm:$0xff]
      %v1287 = vld [vmem:[#allocation2 + $0x280] sm:$0xff]
      %v1288 = vld [vmem:[#allocation2 + $0x288] sm:$0xff]
      %v1289 = vld [vmem:[#allocation2 + $0x290] sm:$0xff]
      %v1290 = vld [vmem:[#allocation2 + $0x298] sm:$0xff]
      %v1291 = vld [vmem:[#allocation2 + $0x2a0] sm:$0xff]
      %v1292 = vld [vmem:[#allocation2 + $0x2a8] sm:$0xff]
      %v1293 = vld [vmem:[#allocation2 + $0x2b0] sm:$0xff]
      %v1294 = vld [vmem:[#allocation2 + $0x2b8] sm:$0xff]
      %v1295 = vld [vmem:[#allocation2 + $0x2c0] sm:$0xff]
      %v1296 = vld [vmem:[#allocation2 + $0x2c8] sm:$0xff]
      %v1297 = vld [vmem:[#allocation2 + $0x2d0] sm:$0xff]
      %v1298 = vld [vmem:[#allocation2 + $0x2d8] sm:$0xff]
      %v1299 = vld [vmem:[#allocation2 + $0x2e0] sm:$0xff]
      %v1300 = vld [vmem:[#allocation2 + $0x2e8] sm:$0xff]
      %v1301 = vld [vmem:[#allocation2 + $0x2f0] sm:$0xff]
      %v1302 = vld [vmem:[#allocation2 + $0x2f8] sm:$0xff]
      %v1303 = vld [vmem:[#allocation2 + $0x300] sm:$0xff]
      %v1304 = vld [vmem:[#allocation2 + $0x308] sm:$0xff]
      %v1305 = vld [vmem:[#allocation2 + $0x310] sm:$0xff]
      %v1306 = vld [vmem:[#allocation2 + $0x318] sm:$0xff]
      %v1307 = vld [vmem:[%s2] sm:$0x1]
      %v1309 = vperm.slane %v1307, 0
      %v1311 = vadd.f32 %v1207, %v1309
      %v1312 = vadd.f32 %v1208, %v1309
      %v1313 = vadd.f32 %v1209, %v1309
      %v1314 = vadd.f32 %v1210, %v1309
      %v1315 = vadd.f32 %v1211, %v1309
      %v1316 = vadd.f32 %v1212, %v1309
      %v1317 = vadd.f32 %v1213, %v1309
      %v1318 = vadd.f32 %v1214, %v1309
      %v1319 = vadd.f32 %v1215, %v1309
      %v1320 = vadd.f32 %v1216, %v1309
      %v1321 = vadd.f32 %v1217, %v1309
      %v1322 = vadd.f32 %v1218, %v1309
      %v1323 = vadd.f32 %v1219, %v1309
      %v1324 = vadd.f32 %v1220, %v1309
      %v1325 = vadd.f32 %v1221, %v1309
      %v1326 = vadd.f32 %v1222, %v1309
      %v1327 = vadd.f32 %v1223, %v1309
      %v1328 = vadd.f32 %v1224, %v1309
      %v1329 = vadd.f32 %v1225, %v1309
      %v1330 = vadd.f32 %v1226, %v1309
      %v1331 = vadd.f32 %v1227, %v1309
      %v1332 = vadd.f32 %v1228, %v1309
      %v1333 = vadd.f32 %v1229, %v1309
      %v1334 = vadd.f32 %v1230, %v1309
      %v1335 = vadd.f32 %v1231, %v1309
      %v1336 = vadd.f32 %v1232, %v1309
      %v1337 = vadd.f32 %v1233, %v1309
      %v1338 = vadd.f32 %v1234, %v1309
      %v1339 = vadd.f32 %v1235, %v1309
      %v1340 = vadd.f32 %v1236, %v1309
      %v1341 = vadd.f32 %v1237, %v1309
      %v1342 = vadd.f32 %v1238, %v1309
      %v1343 = vadd.f32 %v1239, %v1309
      %v1344 = vadd.f32 %v1240, %v1309
      %v1345 = vadd.f32 %v1241, %v1309
      %v1346 = vadd.f32 %v1242, %v1309
      %v1347 = vadd.f32 %v1243, %v1309
      %v1348 = vadd.f32 %v1244, %v1309
      %v1349 = vadd.f32 %v1245, %v1309
      %v1350 = vadd.f32 %v1246, %v1309
      %v1351 = vadd.f32 %v1247, %v1309
      %v1352 = vadd.f32 %v1248, %v1309
      %v1353 = vadd.f32 %v1249, %v1309
      %v1354 = vadd.f32 %v1250, %v1309
      %v1355 = vadd.f32 %v1251, %v1309
      %v1356 = vadd.f32 %v1252, %v1309
      %v1357 = vadd.f32 %v1253, %v1309
      %v1358 = vadd.f32 %v1254, %v1309
      %v1359 = vadd.f32 %v1255, %v1309
      %v1360 = vadd.f32 %v1256, %v1309
      %v1361 = vadd.f32 %v1257, %v1309
      %v1362 = vadd.f32 %v1258, %v1309
      %v1363 = vadd.f32 %v1259, %v1309
      %v1364 = vadd.f32 %v1260, %v1309
      %v1365 = vadd.f32 %v1261, %v1309
      %v1366 = vadd.f32 %v1262, %v1309
      %v1367 = vadd.f32 %v1263, %v1309
      %v1368 = vadd.f32 %v1264, %v1309
      %v1369 = vadd.f32 %v1265, %v1309
      %v1370 = vadd.f32 %v1266, %v1309
      %v1371 = vadd.f32 %v1267, %v1309
      %v1372 = vadd.f32 %v1268, %v1309
      %v1373 = vadd.f32 %v1269, %v1309
      %v1374 = vadd.f32 %v1270, %v1309
      %v1375 = vadd.f32 %v1271, %v1309
      %v1376 = vadd.f32 %v1272, %v1309
      %v1377 = vadd.f32 %v1273, %v1309
      %v1378 = vadd.f32 %v1274, %v1309
      %v1379 = vadd.f32 %v1275, %v1309
      %v1380 = vadd.f32 %v1276, %v1309
      %v1381 = vadd.f32 %v1277, %v1309
      %v1382 = vadd.f32 %v1278, %v1309
      %v1383 = vadd.f32 %v1279, %v1309
      %v1384 = vadd.f32 %v1280, %v1309
      %v1385 = vadd.f32 %v1281, %v1309
      %v1386 = vadd.f32 %v1282, %v1309
      %v1387 = vadd.f32 %v1283, %v1309
      %v1388 = vadd.f32 %v1284, %v1309
      %v1389 = vadd.f32 %v1285, %v1309
      %v1390 = vadd.f32 %v1286, %v1309
      %v1391 = vadd.f32 %v1287, %v1309
      %v1392 = vadd.f32 %v1288, %v1309
      %v1393 = vadd.f32 %v1289, %v1309
      %v1394 = vadd.f32 %v1290, %v1309
      %v1395 = vadd.f32 %v1291, %v1309
      %v1396 = vadd.f32 %v1292, %v1309
      %v1397 = vadd.f32 %v1293, %v1309
      %v1398 = vadd.f32 %v1294, %v1309
      %v1399 = vadd.f32 %v1295, %v1309
      %v1400 = vadd.f32 %v1296, %v1309
      %v1401 = vadd.f32 %v1297, %v1309
      %v1402 = vadd.f32 %v1298, %v1309
      %v1403 = vadd.f32 %v1299, %v1309
      %v1404 = vadd.f32 %v1300, %v1309
      %v1405 = vadd.f32 %v1301, %v1309
      %v1406 = vadd.f32 %v1302, %v1309
      %v1407 = vadd.f32 %v1303, %v1309
      %v1408 = vadd.f32 %v1304, %v1309
      %v1409 = vadd.f32 %v1305, %v1309
      %v1410 = vadd.f32 %v1306, %v1309
      %1411 = vst [vmem:[#allocation2] sm:$0xff] %v1311
      %1412 = vst [vmem:[#allocation2 + $0x8] sm:$0xff] %v1312
      %1413 = vst [vmem:[#allocation2 + $0x10] sm:$0xff] %v1313
      %1414 = vst [vmem:[#allocation2 + $0x18] sm:$0xff] %v1314
      %1415 = vst [vmem:[#allocation2 + $0x20] sm:$0xff] %v1315
      %1416 = vst [vmem:[#allocation2 + $0x28] sm:$0xff] %v1316
      %1417 = vst [vmem:[#allocation2 + $0x30] sm:$0xff] %v1317
      %1418 = vst [vmem:[#allocation2 + $0x38] sm:$0xff] %v1318
      %1419 = vst [vmem:[#allocation2 + $0x40] sm:$0xff] %v1319
      %1420 = vst [vmem:[#allocation2 + $0x48] sm:$0xff] %v1320
      %1421 = vst [vmem:[#allocation2 + $0x50] sm:$0xff] %v1321
      %1422 = vst [vmem:[#allocation2 + $0x58] sm:$0xff] %v1322
      %1423 = vst [vmem:[#allocation2 + $0x60] sm:$0xff] %v1323
      %1424 = vst [vmem:[#allocation2 + $0x68] sm:$0xff] %v1324
      %1425 = vst [vmem:[#allocation2 + $0x70] sm:$0xff] %v1325
      %1426 = vst [vmem:[#allocation2 + $0x78] sm:$0xff] %v1326
      %1427 = vst [vmem:[#allocation2 + $0x80] sm:$0xff] %v1327
      %1428 = vst [vmem:[#allocation2 + $0x88] sm:$0xff] %v1328
      %1429 = vst [vmem:[#allocation2 + $0x90] sm:$0xff] %v1329
      %1430 = vst [vmem:[#allocation2 + $0x98] sm:$0xff] %v1330
      %1431 = vst [vmem:[#allocation2 + $0xa0] sm:$0xff] %v1331
      %1432 = vst [vmem:[#allocation2 + $0xa8] sm:$0xff] %v1332
      %1433 = vst [vmem:[#allocation2 + $0xb0] sm:$0xff] %v1333
      %1434 = vst [vmem:[#allocation2 + $0xb8] sm:$0xff] %v1334
      %1435 = vst [vmem:[#allocation2 + $0xc0] sm:$0xff] %v1335
      %1436 = vst [vmem:[#allocation2 + $0xc8] sm:$0xff] %v1336
      %1437 = vst [vmem:[#allocation2 + $0xd0] sm:$0xff] %v1337
      %1438 = vst [vmem:[#allocation2 + $0xd8] sm:$0xff] %v1338
      %1439 = vst [vmem:[#allocation2 + $0xe0] sm:$0xff] %v1339
      %1440 = vst [vmem:[#allocation2 + $0xe8] sm:$0xff] %v1340
      %1441 = vst [vmem:[#allocation2 + $0xf0] sm:$0xff] %v1341
      %1442 = vst [vmem:[#allocation2 + $0xf8] sm:$0xff] %v1342
      %1443 = vst [vmem:[#allocation2 + $0x100] sm:$0xff] %v1343
      %1444 = vst [vmem:[#allocation2 + $0x108] sm:$0xff] %v1344
      %1445 = vst [vmem:[#allocation2 + $0x110] sm:$0xff] %v1345
      %1446 = vst [vmem:[#allocation2 + $0x118] sm:$0xff] %v1346
      %1447 = vst [vmem:[#allocation2 + $0x120] sm:$0xff] %v1347
      %1448 = vst [vmem:[#allocation2 + $0x128] sm:$0xff] %v1348
      %1449 = vst [vmem:[#allocation2 + $0x130] sm:$0xff] %v1349
      %1450 = vst [vmem:[#allocation2 + $0x138] sm:$0xff] %v1350
      %1451 = vst [vmem:[#allocation2 + $0x140] sm:$0xff] %v1351
      %1452 = vst [vmem:[#allocation2 + $0x148] sm:$0xff] %v1352
      %1453 = vst [vmem:[#allocation2 + $0x150] sm:$0xff] %v1353
      %1454 = vst [vmem:[#allocation2 + $0x158] sm:$0xff] %v1354
      %1455 = vst [vmem:[#allocation2 + $0x160] sm:$0xff] %v1355
      %1456 = vst [vmem:[#allocation2 + $0x168] sm:$0xff] %v1356
      %1457 = vst [vmem:[#allocation2 + $0x170] sm:$0xff] %v1357
      %1458 = vst [vmem:[#allocation2 + $0x178] sm:$0xff] %v1358
      %1459 = vst [vmem:[#allocation2 + $0x180] sm:$0xff] %v1359
      %1460 = vst [vmem:[#allocation2 + $0x188] sm:$0xff] %v1360
      %1461 = vst [vmem:[#allocation2 + $0x190] sm:$0xff] %v1361
      %1462 = vst [vmem:[#allocation2 + $0x198] sm:$0xff] %v1362
      %1463 = vst [vmem:[#allocation2 + $0x1a0] sm:$0xff] %v1363
      %1464 = vst [vmem:[#allocation2 + $0x1a8] sm:$0xff] %v1364
      %1465 = vst [vmem:[#allocation2 + $0x1b0] sm:$0xff] %v1365
      %1466 = vst [vmem:[#allocation2 + $0x1b8] sm:$0xff] %v1366
      %1467 = vst [vmem:[#allocation2 + $0x1c0] sm:$0xff] %v1367
      %1468 = vst [vmem:[#allocation2 + $0x1c8] sm:$0xff] %v1368
      %1469 = vst [vmem:[#allocation2 + $0x1d0] sm:$0xff] %v1369
      %1470 = vst [vmem:[#allocation2 + $0x1d8] sm:$0xff] %v1370
      %1471 = vst [vmem:[#allocation2 + $0x1e0] sm:$0xff] %v1371
      %1472 = vst [vmem:[#allocation2 + $0x1e8] sm:$0xff] %v1372
      %1473 = vst [vmem:[#allocation2 + $0x1f0] sm:$0xff] %v1373
      %1474 = vst [vmem:[#allocation2 + $0x1f8] sm:$0xff] %v1374
      %1475 = vst [vmem:[#allocation2 + $0x200] sm:$0xff] %v1375
      %1476 = vst [vmem:[#allocation2 + $0x208] sm:$0xff] %v1376
      %1477 = vst [vmem:[#allocation2 + $0x210] sm:$0xff] %v1377
      %1478 = vst [vmem:[#allocation2 + $0x218] sm:$0xff] %v1378
      %1479 = vst [vmem:[#allocation2 + $0x220] sm:$0xff] %v1379
      %1480 = vst [vmem:[#allocation2 + $0x228] sm:$0xff] %v1380
      %1481 = vst [vmem:[#allocation2 + $0x230] sm:$0xff] %v1381
      %1482 = vst [vmem:[#allocation2 + $0x238] sm:$0xff] %v1382
      %1483 = vst [vmem:[#allocation2 + $0x240] sm:$0xff] %v1383
      %1484 = vst [vmem:[#allocation2 + $0x248] sm:$0xff] %v1384
      %1485 = vst [vmem:[#allocation2 + $0x250] sm:$0xff] %v1385
      %1486 = vst [vmem:[#allocation2 + $0x258] sm:$0xff] %v1386
      %1487 = vst [vmem:[#allocation2 + $0x260] sm:$0xff] %v1387
      %1488 = vst [vmem:[#allocation2 + $0x268] sm:$0xff] %v1388
      %1489 = vst [vmem:[#allocation2 + $0x270] sm:$0xff] %v1389
      %1490 = vst [vmem:[#allocation2 + $0x278] sm:$0xff] %v1390
      %1491 = vst [vmem:[#allocation2 + $0x280] sm:$0xff] %v1391
      %1492 = vst [vmem:[#allocation2 + $0x288] sm:$0xff] %v1392
      %1493 = vst [vmem:[#allocation2 + $0x290] sm:$0xff] %v1393
      %1494 = vst [vmem:[#allocation2 + $0x298] sm:$0xff] %v1394
      %1495 = vst [vmem:[#allocation2 + $0x2a0] sm:$0xff] %v1395
      %1496 = vst [vmem:[#allocation2 + $0x2a8] sm:$0xff] %v1396
      %1497 = vst [vmem:[#allocation2 + $0x2b0] sm:$0xff] %v1397
      %1498 = vst [vmem:[#allocation2 + $0x2b8] sm:$0xff] %v1398
      %1499 = vst [vmem:[#allocation2 + $0x2c0] sm:$0xff] %v1399
      %1500 = vst [vmem:[#allocation2 + $0x2c8] sm:$0xff] %v1400
      %1501 = vst [vmem:[#allocation2 + $0x2d0] sm:$0xff] %v1401
      %1502 = vst [vmem:[#allocation2 + $0x2d8] sm:$0xff] %v1402
      %1503 = vst [vmem:[#allocation2 + $0x2e0] sm:$0xff] %v1403
      %1504 = vst [vmem:[#allocation2 + $0x2e8] sm:$0xff] %v1404
      %1505 = vst [vmem:[#allocation2 + $0x2f0] sm:$0xff] %v1405
      %1506 = vst [vmem:[#allocation2 + $0x2f8] sm:$0xff] %v1406
      %1507 = vst [vmem:[#allocation2 + $0x300] sm:$0xff] %v1407
      %1508 = vst [vmem:[#allocation2 + $0x308] sm:$0xff] %v1408
      %1509 = vst [vmem:[#allocation2 + $0x310] sm:$0xff] %v1409
      %1510 = vst [vmem:[#allocation2 + $0x318] sm:$0xff] %v1410
    $region21: #{tpu_custom_call.1} parent=1 // pred_fallthru
      _
    // Predicated region
    $region22: #{tpu_custom_call.1} parent=1 // pred_check
      _
    $region23: #{tpu_custom_call.1} parent=1 // pred_check_branch
      %1512 = sbr.rel (0) target = $region25
    $region24: #{tpu_custom_call.1} parent=1 // pred_region
      %1514 = vsyncadd [#allocation3], 0
      %s1515 = sshll.u32 [#allocation2], 4
      %s1516 = int_to_ptr.vmem [resolvable:$true] %s1515
      %s1517 = sshll.u32 %s3, 4
      %s1518 = int_to_ptr.hbm [resolvable:$true] %s1517
      %1523 = dma.vmem_to_hbm [thread:$0]  %s1516, 12800, %s1518, [#allocation3], 128, 128, 8
    $region25: #{tpu_custom_call.1} parent=1 // pred_fallthru
      _
    // Predicated region
    $region26: #{tpu_custom_call.1} parent=1 // pred_check
      _
    $region27: #{tpu_custom_call.1} parent=1 // pred_check_branch
      %1525 = sbr.rel (0) target = $region29
    $region28: #{tpu_custom_call.1} parent=1 // pred_region
      %1527 = dma.done [#allocation3], 12800
    $region29: #{tpu_custom_call.1} parent=1 // pred_fallthru
      _
    %1528 = vsyncpa [#allocation3], 1

</llo_original>
